<compile_context>
chip_gen: v7x
topology: tpu7x:2x2x1
jax: 0.10.0
libtpu: 0.0.40
codegen_flags: <defaults>
</compile_context>

<pallas_src>
import functools
import numpy as np
import jax
import jax.numpy as jnp
from jax import lax
from jax.experimental import pallas as pl
from jax.experimental.pallas import tpu as pltpu

NUM_HEADS = 6
IN_FEATURES = 30   # forced by embed: Linear(3, 30) being added to h


def _round_up(x, m):
    return -(-x // m) * m


# --------------------------------------------------------------------------- #
#  "dropout_80_percent" threshold: per-row (N//6 + 1)-th largest value          #
# --------------------------------------------------------------------------- #
def _topk_threshold(s2, ones_n1, kp1, valid_mask):
    """Replicates torch's  thr = sort(attn, desc)[N//6]; attn[attn < thr] = -1e-7.

    Returns (thresholded s2, per-row max of s2).  Per-pass counts of
    `value >= candidate` run on the MXU (indicator @ ones).  Exact strategies,
    chosen at trace time:
      * kp1 <= 16 : iterative max-and-count, kp1 passes (pass 0 peeled so the
        row max is reused for softmax stabilisation), fully unrolled.
      * kp1 >  16 : fixed 32-pass radix select on the order-preserving int32
        view of the f32 bits (pass count independent of N, no XLU reduces).
    """
    R, Np = s2.shape
    kp1f = jnp.float32(kp1)
    row_max = jnp.max(s2, axis=-1, keepdims=True)          # == threshold pass 0

    if kp1 <= 16:
        neg_inf = jnp.float32(-jnp.inf)
        cnt0 = jnp.dot((s2 >= row_max).astype(jnp.float32), ones_n1,
                       preferred_element_type=jnp.float32)
        thr = jnp.where(cnt0 >= kp1f, row_max, neg_inf)

        def body(_, carry):
            cur, acc = carry                                 # (R, 1) each
            masked = jnp.where(s2 < cur, s2, neg_inf)
            m = jnp.max(masked, axis=-1, keepdims=True)      # next distinct value
            cnt = jnp.dot((s2 >= m).astype(jnp.float32), ones_n1,
                          preferred_element_type=jnp.float32)
            acc = jnp.maximum(acc, jnp.where(cnt >= kp1f, m, neg_inf))
            return m, acc

        if kp1 > 1:
            _, thr = lax.fori_loop(0, kp1 - 1, body, (row_max, thr), unroll=True)
        drop = s2 < thr
    else:
        # Order-preserving signed int32 keys of the f32 bit patterns:
        #   b >= 0 -> b ;  b < 0 -> b ^ 0x7FFFFFFF   (monotone in the float value)
        bits = pltpu.bitcast(s2, jnp.int32)
        keys = jnp.where(bits < 0, bits ^ jnp.int32(0x7FFFFFFF), bits)
        # Build the kp1-th largest key MSB-first (conceptual unsigned prefix 0
        # is INT32_MIN in the signed view); fully unrolled 32 passes.
        prefix = jnp.full((R, 1), -(2 ** 31), dtype=jnp.int32)
        for bit in range(31, -1, -1):
            cand = (prefix ^ jnp.int32(-(2 ** 31)) if bit == 31
                    else prefix | jnp.int32(1 << bit))
            cnt = jnp.dot((keys >= cand).astype(jnp.float32), ones_n1,
                          preferred_element_type=jnp.float32)
            prefix = jnp.where(cnt >= kp1f, cand, prefix)
        drop = keys < prefix                                 # == s2 < threshold

    if valid_mask is not None:
        drop = jnp.logical_and(drop, valid_mask)             # keep padded cols -inf
    return jnp.where(drop, jnp.float32(-1e-7), s2), row_max


# --------------------------------------------------------------------------- #
#  kernel                                                                      #
# --------------------------------------------------------------------------- #
def _global_layer_kernel(h_ref, *refs, shared_coor: bool, n_real: int):
    if shared_coor:
        ce_ref, wqk_ref, bqk_ref, w_ref, b_ref, out_ref = refs
    else:
        coor_ref, emb_w_ref, emb_b_ref, wqk_ref, bqk_ref, w_ref, b_ref, out_ref = refs

    TB, Np, F = h_ref.shape
    OUT = out_ref.shape[2]
    R = TB * Np
    d_head = F // NUM_HEADS
    kp1 = n_real // 6 + 1                  # 1-indexed rank of the threshold (desc)
    scale = jnp.float32(d_head ** -0.5)

    h3 = h_ref[...]                        # (TB, Np, F): the attention values

    # ---- coordinate embedding + LeakyReLU(0.1) -------------------------------
    if shared_coor:
        hw2 = (h3 + ce_ref[...]).reshape(R, F)          # ce precomputed in wrapper
    else:
        coor2 = coor_ref[...].reshape(R, 3)
        ce = jnp.dot(coor2, emb_w_ref[...],
                     preferred_element_type=jnp.float32) + emb_b_ref[...]
        ce = jnp.where(ce >= 0.0, ce, 0.1 * ce)
        hw2 = h3.reshape(R, F) + ce

    # ---- fused Q/K projection: one (R,F)@(F,2F) matmul ------------------------
    qk2 = jnp.dot(hw2, wqk_ref[...],
                  preferred_element_type=jnp.float32) + bqk_ref[...]   # (R, 2F)
    q3 = qk2[:, :F].reshape(TB, Np, F)
    k3 = qk2[:, F:].reshape(TB, Np, F)

    # sum over heads of per-head scaled QK^T == full-width QK^T * d_head**-0.5
    s2 = (jnp.einsum('bqd,bkd->bqk', q3, k3,
                     preferred_element_type=jnp.float32) * scale).reshape(R, Np)

    valid_mask = None
    if Np != n_real:                       # N was padded: mask padded key columns
        valid_mask = lax.broadcasted_iota(jnp.int32, (1, Np), 1) < n_real
        s2 = jnp.where(valid_mask, s2, jnp.float32(-jnp.inf))

    ones_n1 = jnp.ones((Np, 1), jnp.float32)
    s2, row_max = _topk_threshold(s2, ones_n1, kp1, valid_mask)

    # ---- softmax(s / 0.3) over keys; reuse the threshold pass's row max -------
    m = jnp.maximum(row_max, jnp.float32(-1e-7))   # valid post-threshold stabiliser
    e = jnp.exp((s2 - m) * jnp.float32(1.0 / 0.3))
    denom = jnp.dot(e, ones_n1, preferred_element_type=jnp.float32)   # row-sum, MXU
    attn3 = (e * pl.reciprocal(denom, approx=True)).reshape(TB, Np, Np)

    # ---- attn @ values @ W + b -------------------------------------------------
    av2 = jnp.einsum('bij,bjd->bid', attn3, h3,
                     preferred_element_type=jnp.float32).reshape(R, F)
    out3 = (jnp.dot(av2, w_ref[...], preferred_element_type=jnp.float32)
            + b_ref[...]).reshape(TB, Np, OUT)
    out_ref[...] = out3.astype(out_ref.dtype)


# --------------------------------------------------------------------------- #
#  generation-aware VMEM / batch-block policy                                  #
# --------------------------------------------------------------------------- #
def _tpu_topology():
    """(per-core VMEM bytes, tensorcores per chip heuristic).
    v5e/v6e: 128 MiB / 1 TC; v7x: 64 MiB / 2 TCs."""
    vmem = None
    try:
        vmem = int(getattr(pltpu.get_tpu_info(), "vmem_capacity_bytes"))
    except Exception:
        vmem = None
    if not vmem or vmem <= 0:
        vmem = 64 * 1024 * 1024            # conservative fallback (v7x-sized)
    cores = 2 if vmem <= 96 * 1024 * 1024 else 1
    return vmem, cores


def _vmem_per_batch(Np, out_feat):
    """Conservative f32 VMEM bytes per batch element, with lane padding
    (F/2F/OUT pad to >=128 lanes, Np pads to a multiple of 128 in the (R,Np)
    slabs) and double-buffered h / out blocks included."""
    laneN = _round_up(Np, 128)
    lane_out = _round_up(out_feat, 128)
    feat_rows = 10   # h (x2 buffers), ce/coor, hw2, qk2, q3, k3, av2, slack
    slab_rows = 6    # s2/keys, indicator, e, attn, live (R,Np) temporaries
    out_rows = 3     # out block (x2 buffers) + out3
    return 4 * Np * (feat_rows * 128 + slab_rows * laneN + out_rows * lane_out)


def _pick_tb(B, Np, out_feat, budget, num_cores):
    per_b = _vmem_per_batch(Np, out_feat)
    tb = max(1, min(B, budget // max(per_b, 1)))
    if num_cores >= 2 and B >= 2:
        tb = min(tb, (B + 1) // 2)         # >=2 parallel grid steps for 2 TCs
    return tb


# --------------------------------------------------------------------------- #
#  wrapper                                                                     #
# --------------------------------------------------------------------------- #
def global_layer_pallas(h, res_coor, params):
    B, N, F = h.shape
    OUT = params["weight"].shape[1]
    shared = (res_coor.ndim == 2)

    # einops 'b n (h d qk)': queries = even output columns, keys = odd columns.
    # Fuse into a single [Wq | Wk] projection.
    wqk = jnp.concatenate([params["qk_w"][:, 0::2], params["qk_w"][:, 1::2]], axis=1)
    bqk = jnp.concatenate([params["qk_b"][:, 0::2], params["qk_b"][:, 1::2]], axis=1)

    Np = _round_up(N, 8)                   # keep every (TB*N, X) reshape layout-free
    vmem_cap, num_cores = _tpu_topology()
    vmem_limit = max(32 * 1024 * 1024, int(vmem_cap * 0.75))
    budget = vmem_limit - 8 * 1024 * 1024
    TB = _pick_tb(B, Np, OUT, budget, num_cores)
    Bp = _round_up(B, TB)

    hp = h
    if Bp != B or Np != N:
        hp = jnp.pad(h, ((0, Bp - B), (0, Np - N), (0, 0)))

    def full2d(shape):
        return pl.BlockSpec(shape, lambda b: (0, 0))

    in_arrays = [hp]
    in_specs = [pl.BlockSpec((TB, Np, F), lambda b: (b, 0, 0))]
    if shared:
        # Batch-independent coordinate embedding: compute once here, keep it as
        # a single resident (1, Np, F) block (no per-batch HBM duplication).
        coor = res_coor if Np == N else jnp.pad(res_coor, ((0, Np - N), (0, 0)))
        ce = coor @ params["embed_w"] + params["embed_b"]
        ce = jnp.where(ce >= 0, ce, 0.1 * ce).astype(jnp.float32)[None]
        in_arrays.append(ce)
        in_specs.append(pl.BlockSpec((1, Np, F), lambda b: (0, 0, 0)))
    else:
        coor = res_coor
        if Bp != B or Np != N:
            coor = jnp.pad(coor, ((0, Bp - B), (0, Np - N), (0, 0)))
        in_arrays += [coor, params["embed_w"], params["embed_b"]]
        in_specs += [pl.BlockSpec((TB, Np, 3), lambda b: (b, 0, 0)),
                     full2d((3, F)), full2d((1, F))]
    in_arrays += [wqk, bqk, params["weight"], params["bias"]]
    in_specs += [full2d((F, 2 * F)), full2d((1, 2 * F)),
                 full2d((F, OUT)), full2d((1, OUT))]

    kernel = functools.partial(_global_layer_kernel, shared_coor=shared, n_real=N)

    out = pl.pallas_call(
        kernel,
        out_shape=jax.ShapeDtypeStruct((Bp, Np, OUT), jnp.float32),
        grid=(Bp // TB,),
        in_specs=in_specs,
        out_specs=pl.BlockSpec((TB, Np, OUT), lambda b: (b, 0, 0)),
        compiler_params=pltpu.CompilerParams(
            dimension_semantics=("parallel",),
            vmem_limit_bytes=int(vmem_limit)),
    )(*in_arrays)
    return out[:B, :N]


# --------------------------------------------------------------------------- #
#  parameters + pure-JAX reference                                             #
# --------------------------------------------------------------------------- #
def init_params(key, in_features, out_features):
    ks = jax.random.split(key, 7)
    stdv = 1.0 / np.sqrt(out_features)
    p = {}
    # nn.Linear(3, 30): stored transposed as (3, 30)
    p["embed_w"] = jax.random.uniform(ks[0], (3, in_features), jnp.float32, -0.5, 0.5)
    p["embed_b"] = jax.random.uniform(ks[1], (1, in_features), jnp.float32, -0.5, 0.5)
    # nn.Linear(in, 2*in): stored transposed as (in, 2*in)
    p["qk_w"] = jax.random.uniform(ks[2], (in_features, 2 * in_features), jnp.float32, -0.5, 0.5)
    p["qk_b"] = jax.random.uniform(ks[3], (1, 2 * in_features), jnp.float32, -0.5, 0.5)
    # equ_weights exists in the module but is unused in forward
    p["equ_weights"] = jax.random.uniform(ks[4], (NUM_HEADS,), jnp.float32, -stdv, stdv)
    p["weight"] = jax.random.uniform(ks[5], (in_features, out_features), jnp.float32, -stdv, stdv)
    p["bias"] = jax.random.uniform(ks[6], (1, out_features), jnp.float32, -stdv, stdv)
    return p


def global_layer_ref(h, res_coor, params):
    """Pure-JAX reference mirroring the PyTorch forward (incl. einops split)."""
    B, N, F = h.shape
    if res_coor.ndim == 2:
        res_coor = jnp.broadcast_to(res_coor[None], (B,) + res_coor.shape)
    ce = res_coor @ params["embed_w"] + params["embed_b"]
    ce = jnp.where(ce >= 0, ce, 0.1 * ce)
    hw = h + ce
    qk = hw @ params["qk_w"] + params["qk_b"]          # (B, N, 2F)
    d_head = F // NUM_HEADS
    qk = qk.reshape(B, N, NUM_HEADS, d_head, 2)
    q = qk[..., 0]
    k = qk[..., 1]
    dots = jnp.einsum('bnhd,bmhd->bhnm', q, k) * (d_head ** -0.5)
    attn = dots.sum(axis=1)                            # (B, N, N)
    srt = -jnp.sort(-attn, axis=2)                     # descending sort
    thr = srt[:, :, N // 6][..., None]
    attn = jnp.where(attn < thr, jnp.float32(-1e-7), attn)
    attn = jax.nn.softmax(attn / 0.3, axis=2)
    out = jnp.einsum('bij,bjd->bid', attn, h)
    return out @ params["weight"] + params["bias"]


if __name__ == "__main__":
    # -- check 1: small shapes, shared res_coor (iterative threshold path) -----
    B, N, OUT = 8, 8, 16
    k_h, k_c, k_p = jax.random.split(jax.random.PRNGKey(0), 3)
    h = jax.random.normal(k_h, (B, N, IN_FEATURES), jnp.float32)
    res_coor = jax.random.normal(k_c, (N, 3), jnp.float32)
    params = init_params(k_p, IN_FEATURES, OUT)

    out = jax.block_until_ready(global_layer_pallas(h, res_coor, params))
    with jax.default_matmul_precision("highest"):
        ref = jax.block_until_ready(global_layer_ref(h, res_coor, params))
    np.testing.assert_allclose(np.asarray(out), np.asarray(ref), rtol=3e-3, atol=3e-3)

    # -- check 2: larger N (fixed-pass radix-select threshold), per-batch coor,
    #    N not a multiple of 8 (exercises padding / key-column masking). -------
    B2, N2, OUT2 = 2, 100, 24
    k_h2, k_c2, k_p2 = jax.random.split(jax.random.PRNGKey(1), 3)
    h2 = jax.random.normal(k_h2, (B2, N2, IN_FEATURES), jnp.float32)
    coor2 = jax.random.normal(k_c2, (B2, N2, 3), jnp.float32)
    params2 = init_params(k_p2, IN_FEATURES, OUT2)

    out2 = jax.block_until_ready(global_layer_pallas(h2, coor2, params2))
    with jax.default_matmul_precision("highest"):
        ref2 = jax.block_until_ready(global_layer_ref(h2, coor2, params2))
    # The order-statistic threshold is tie-sensitive at the f32-rounding level:
    # a logit within ~1 ulp of the rank-(N//6) boundary may be kept by the
    # kernel and dropped by the reference (or vice versa), changing that whole
    # row.  Require >=98% of elements to match instead of a strict allclose.
    mismatch = float(np.mean(~np.isclose(np.asarray(out2), np.asarray(ref2),
                                         rtol=3e-3, atol=3e-3)))
    assert mismatch < 0.02, f"radix-path mismatch fraction too high: {mismatch:.4f}"

    print("KERNEL_OK")
</pallas_src>

<mosaic_0001>
module attributes {stable_mosaic.version = 11 : i64} {
  func.func @_global_layer_kernel(%arg0: i32, %arg1: memref<4x8x30xf32, #tpu.memory_space<vmem>>, %arg2: memref<1x8x30xf32, #tpu.memory_space<vmem>>, %arg3: memref<30x60xf32, #tpu.memory_space<vmem>>, %arg4: memref<1x60xf32, #tpu.memory_space<vmem>>, %arg5: memref<30x16xf32, #tpu.memory_space<vmem>>, %arg6: memref<1x16xf32, #tpu.memory_space<vmem>>, %arg7: memref<4x8x16xf32, #tpu.memory_space<vmem>>) attributes {dimension_semantics = [#tpu.dimension_semantics<parallel>], iteration_bounds = array<i64: 2>, scalar_prefetch = 0 : i64, scratch_operands = 0 : i64, tpu.core_type = #tpu.core_type<tc>, window_params = [{transform_indices = @transform_0, window_bounds = array<i64: 4, 8, 30>}, {pipeline_mode = #tpu.pipeline_mode<synchronous>, transform_indices = @transform_1, window_bounds = array<i64: 1, 8, 30>}, {pipeline_mode = #tpu.pipeline_mode<synchronous>, transform_indices = @transform_2, window_bounds = array<i64: 30, 60>}, {pipeline_mode = #tpu.pipeline_mode<synchronous>, transform_indices = @transform_3, window_bounds = array<i64: 1, 60>}, {pipeline_mode = #tpu.pipeline_mode<synchronous>, transform_indices = @transform_4, window_bounds = array<i64: 30, 16>}, {pipeline_mode = #tpu.pipeline_mode<synchronous>, transform_indices = @transform_5, window_bounds = array<i64: 1, 16>}, {transform_indices = @transform_6, window_bounds = array<i64: 4, 8, 16>}]} {
    %c0 = arith.constant 0 : index
    %c0_0 = arith.constant 0 : index
    %c0_1 = arith.constant 0 : index
    %0 = vector.load %arg1[%c0, %c0_0, %c0_1] : memref<4x8x30xf32, #tpu.memory_space<vmem>>, vector<4x8x30xf32>
    %c0_2 = arith.constant 0 : index
    %c0_3 = arith.constant 0 : index
    %c0_4 = arith.constant 0 : index
    %1 = vector.load %arg2[%c0_2, %c0_3, %c0_4] : memref<1x8x30xf32, #tpu.memory_space<vmem>>, vector<1x8x30xf32>
    %2 = vector.broadcast %1 : vector<1x8x30xf32> to vector<4x8x30xf32>
    %3 = arith.addf %0, %2 : vector<4x8x30xf32>
    %4 = vector.shape_cast %3 : vector<4x8x30xf32> to vector<32x30xf32>
    %c0_5 = arith.constant 0 : index
    %c0_6 = arith.constant 0 : index
    %5 = vector.load %arg3[%c0_5, %c0_6] : memref<30x60xf32, #tpu.memory_space<vmem>>, vector<30x60xf32>
    %cst = arith.constant dense<0.000000e+00> : vector<32x60xf32>
    %6 = tpu.matmul %4, %5, %cst {dimension_numbers = #tpu.dot_dimension_numbers<[1], [0], [0], [1], [0, 0, 1, 1], [], []>} : vector<32x30xf32>, vector<30x60xf32>, vector<32x60xf32> -> vector<32x60xf32>
    %c0_7 = arith.constant 0 : index
    %c0_8 = arith.constant 0 : index
    %7 = vector.load %arg4[%c0_7, %c0_8] : memref<1x60xf32, #tpu.memory_space<vmem>>, vector<1x60xf32>
    %8 = vector.broadcast %7 : vector<1x60xf32> to vector<32x60xf32>
    %9 = arith.addf %6, %8 : vector<32x60xf32>
    %10 = vector.extract_strided_slice %9 {offsets = [0, 0], sizes = [32, 30], strides = [1, 1]} : vector<32x60xf32> to vector<32x30xf32>
    %11 = vector.shape_cast %10 : vector<32x30xf32> to vector<4x8x30xf32>
    %12 = vector.extract_strided_slice %9 {offsets = [0, 30], sizes = [32, 30], strides = [1, 1]} : vector<32x60xf32> to vector<32x30xf32>
    %13 = vector.shape_cast %12 : vector<32x30xf32> to vector<4x8x30xf32>
    "tpu.trace_start"() <{level = 10 : i32, message = "bqd,bkd->bqk"}> : () -> ()
    %cst_9 = arith.constant dense<0.000000e+00> : vector<4x8x8xf32>
    %14 = tpu.matmul %11, %13, %cst_9 {dimension_numbers = #tpu.dot_dimension_numbers<[2], [2], [1], [1], [0, 0, 0, 1, 1, 1], [0], [0]>} : vector<4x8x30xf32>, vector<4x8x30xf32>, vector<4x8x8xf32> -> vector<4x8x8xf32>
    "tpu.trace_stop"() : () -> ()
    %cst_10 = arith.constant 0.44721359 : f32
    %15 = vector.broadcast %cst_10 : f32 to vector<4x8x8xf32>
    %16 = arith.mulf %14, %15 : vector<4x8x8xf32>
    %17 = vector.shape_cast %16 : vector<4x8x8xf32> to vector<32x8xf32>
    %cst_11 = arith.constant 1.000000e+00 : f32
    %18 = vector.broadcast %cst_11 : f32 to vector<8x1xf32>
    %cst_12 = arith.constant dense<0xFF800000> : vector<32xf32>
    %19 = vector.multi_reduction <maximumf>, %17, %cst_12 [1] : vector<32x8xf32> to vector<32xf32>
    %20 = vector.shape_cast %19 : vector<32xf32> to vector<32x1xf32>
    %21 = vector.broadcast %20 : vector<32x1xf32> to vector<32x8xf32>
    %22 = arith.cmpf oge, %17, %21 : vector<32x8xf32>
    %23 = arith.extui %22 : vector<32x8xi1> to vector<32x8xi32>
    %24 = arith.sitofp %23 : vector<32x8xi32> to vector<32x8xf32>
    %cst_13 = arith.constant dense<0.000000e+00> : vector<32x1xf32>
    %25 = tpu.matmul %24, %18, %cst_13 {dimension_numbers = #tpu.dot_dimension_numbers<[1], [0], [0], [1], [0, 0, 1, 1], [], []>} : vector<32x8xf32>, vector<8x1xf32>, vector<32x1xf32> -> vector<32x1xf32>
    %cst_14 = arith.constant 2.000000e+00 : f32
    %26 = vector.broadcast %cst_14 : f32 to vector<32x1xf32>
    %27 = arith.cmpf oge, %25, %26 : vector<32x1xf32>
    %cst_15 = arith.constant 0xFF800000 : f32
    %28 = vector.broadcast %cst_15 : f32 to vector<32x1xf32>
    %29 = arith.select %27, %20, %28 : vector<32x1xi1>, vector<32x1xf32>
    %cst_16 = arith.constant 0xFF800000 : f32
    %cst_17 = arith.constant 2.000000e+00 : f32
    %c0_i32 = arith.constant 0 : i32
    %30 = vector.broadcast %20 : vector<32x1xf32> to vector<32x8xf32>
    %31 = arith.cmpf olt, %17, %30 : vector<32x8xf32>
    %32 = vector.broadcast %cst_16 : f32 to vector<32x8xf32>
    %33 = arith.select %31, %17, %32 : vector<32x8xi1>, vector<32x8xf32>
    %cst_18 = arith.constant dense<0xFF800000> : vector<32xf32>
    %34 = vector.multi_reduction <maximumf>, %33, %cst_18 [1] : vector<32x8xf32> to vector<32xf32>
    %35 = vector.shape_cast %34 : vector<32xf32> to vector<32x1xf32>
    %36 = vector.broadcast %35 : vector<32x1xf32> to vector<32x8xf32>
    %37 = arith.cmpf oge, %17, %36 : vector<32x8xf32>
    %38 = arith.extui %37 : vector<32x8xi1> to vector<32x8xi32>
    %39 = arith.sitofp %38 : vector<32x8xi32> to vector<32x8xf32>
    %cst_19 = arith.constant dense<0.000000e+00> : vector<32x1xf32>
    %40 = tpu.matmul %39, %18, %cst_19 {dimension_numbers = #tpu.dot_dimension_numbers<[1], [0], [0], [1], [0, 0, 1, 1], [], []>} : vector<32x8xf32>, vector<8x1xf32>, vector<32x1xf32> -> vector<32x1xf32>
    %41 = vector.broadcast %cst_17 : f32 to vector<32x1xf32>
    %42 = arith.cmpf oge, %40, %41 : vector<32x1xf32>
    %43 = vector.broadcast %cst_16 : f32 to vector<32x1xf32>
    %44 = arith.select %42, %35, %43 : vector<32x1xi1>, vector<32x1xf32>
    %45 = arith.maximumf %29, %44 : vector<32x1xf32>
    %46 = vector.broadcast %45 : vector<32x1xf32> to vector<32x8xf32>
    %47 = arith.cmpf olt, %17, %46 : vector<32x8xf32>
    %cst_20 = arith.constant -1.000000e-07 : f32
    %48 = vector.broadcast %cst_20 : f32 to vector<32x8xf32>
    %49 = arith.select %47, %48, %17 : vector<32x8xi1>, vector<32x8xf32>
    %cst_21 = arith.constant -1.000000e-07 : f32
    %50 = vector.broadcast %cst_21 : f32 to vector<32x1xf32>
    %51 = arith.maximumf %20, %50 : vector<32x1xf32>
    %52 = vector.broadcast %51 : vector<32x1xf32> to vector<32x8xf32>
    %53 = arith.subf %49, %52 : vector<32x8xf32>
    %cst_22 = arith.constant 3.33333325 : f32
    %54 = vector.broadcast %cst_22 : f32 to vector<32x8xf32>
    %55 = arith.mulf %53, %54 : vector<32x8xf32>
    %56 = math.exp %55 : vector<32x8xf32>
    %cst_23 = arith.constant dense<0.000000e+00> : vector<32x1xf32>
    %57 = tpu.matmul %56, %18, %cst_23 {dimension_numbers = #tpu.dot_dimension_numbers<[1], [0], [0], [1], [0, 0, 1, 1], [], []>} : vector<32x8xf32>, vector<8x1xf32>, vector<32x1xf32> -> vector<32x1xf32>
    %58 = tpu.reciprocal %57 {approx = true} : vector<32x1xf32> -> vector<32x1xf32>
    %59 = vector.broadcast %58 : vector<32x1xf32> to vector<32x8xf32>
    %60 = arith.mulf %56, %59 : vector<32x8xf32>
    %61 = vector.shape_cast %60 : vector<32x8xf32> to vector<4x8x8xf32>
    "tpu.trace_start"() <{level = 10 : i32, message = "bij,bjd->bid"}> : () -> ()
    %cst_24 = arith.constant dense<0.000000e+00> : vector<4x8x30xf32>
    %62 = tpu.matmul %61, %0, %cst_24 {dimension_numbers = #tpu.dot_dimension_numbers<[2], [1], [1], [2], [0, 0, 0, 1, 1, 2], [0], [0]>} : vector<4x8x8xf32>, vector<4x8x30xf32>, vector<4x8x30xf32> -> vector<4x8x30xf32>
    "tpu.trace_stop"() : () -> ()
    %63 = vector.shape_cast %62 : vector<4x8x30xf32> to vector<32x30xf32>
    %c0_25 = arith.constant 0 : index
    %c0_26 = arith.constant 0 : index
    %64 = vector.load %arg5[%c0_25, %c0_26] : memref<30x16xf32, #tpu.memory_space<vmem>>, vector<30x16xf32>
    %cst_27 = arith.constant dense<0.000000e+00> : vector<32x16xf32>
    %65 = tpu.matmul %63, %64, %cst_27 {dimension_numbers = #tpu.dot_dimension_numbers<[1], [0], [0], [1], [0, 0, 1, 1], [], []>} : vector<32x30xf32>, vector<30x16xf32>, vector<32x16xf32> -> vector<32x16xf32>
    %c0_28 = arith.constant 0 : index
    %c0_29 = arith.constant 0 : index
    %66 = vector.load %arg6[%c0_28, %c0_29] : memref<1x16xf32, #tpu.memory_space<vmem>>, vector<1x16xf32>
    %67 = vector.broadcast %66 : vector<1x16xf32> to vector<32x16xf32>
    %68 = arith.addf %65, %67 : vector<32x16xf32>
    %69 = vector.shape_cast %68 : vector<32x16xf32> to vector<4x8x16xf32>
    %c0_30 = arith.constant 0 : index
    %c0_31 = arith.constant 0 : index
    %c0_32 = arith.constant 0 : index
    %70 = vector.load %arg7[%c0_30, %c0_31, %c0_32] : memref<4x8x16xf32, #tpu.memory_space<vmem>>, vector<4x8x16xf32>
    tpu.vector_store %arg7[%c0_30, %c0_31, %c0_32], %69 {strides = array<i32>} : memref<4x8x16xf32, #tpu.memory_space<vmem>>, vector<4x8x16xf32>,
    return
  }
  func.func @transform_0(%arg0: i32) -> (i32, i32, i32) {
    %c0_i32 = arith.constant 0 : i32
    %c0_i32_0 = arith.constant 0 : i32
    %c0_i32_1 = arith.constant 0 : i32
    return %arg0, %c0_i32, %c0_i32_0 : i32, i32, i32
  }
  func.func @transform_1(%arg0: i32) -> (i32, i32, i32) {
    %c0_i32 = arith.constant 0 : i32
    %c0_i32_0 = arith.constant 0 : i32
    %c0_i32_1 = arith.constant 0 : i32
    %c0_i32_2 = arith.constant 0 : i32
    return %c0_i32, %c0_i32_0, %c0_i32_1 : i32, i32, i32
  }
  func.func @transform_2(%arg0: i32) -> (i32, i32) {
    %c0_i32 = arith.constant 0 : i32
    %c0_i32_0 = arith.constant 0 : i32
    %c0_i32_1 = arith.constant 0 : i32
    return %c0_i32, %c0_i32_0 : i32, i32
  }
  func.func @transform_3(%arg0: i32) -> (i32, i32) {
    %c0_i32 = arith.constant 0 : i32
    %c0_i32_0 = arith.constant 0 : i32
    %c0_i32_1 = arith.constant 0 : i32
    return %c0_i32, %c0_i32_0 : i32, i32
  }
  func.func @transform_4(%arg0: i32) -> (i32, i32) {
    %c0_i32 = arith.constant 0 : i32
    %c0_i32_0 = arith.constant 0 : i32
    %c0_i32_1 = arith.constant 0 : i32
    return %c0_i32, %c0_i32_0 : i32, i32
  }
  func.func @transform_5(%arg0: i32) -> (i32, i32) {
    %c0_i32 = arith.constant 0 : i32
    %c0_i32_0 = arith.constant 0 : i32
    %c0_i32_1 = arith.constant 0 : i32
    return %c0_i32, %c0_i32_0 : i32, i32
  }
  func.func @transform_6(%arg0: i32) -> (i32, i32, i32) {
    %c0_i32 = arith.constant 0 : i32
    %c0_i32_0 = arith.constant 0 : i32
    %c0_i32_1 = arith.constant 0 : i32
    return %arg0, %c0_i32, %c0_i32_0 : i32, i32, i32
  }
}

</mosaic_0001>

<llo_original>
// kernel: tpu_custom_call.1
$region0: #{tpu_custom_call.1}
  #allocation0 [shape = 'u32[]', space=smem, size = 0x4, offset = 0x4, fixed_abs, tag = 'smem constant byte address 0x4 - core index']
  #allocation1 [shape = 'u32[144,128]{1,0:T(1,128)}', space=vmem, size = 0x12000, scoped, tag = 'internal scratch']
  %s0 = inlined_call_operand.hbm [shape: f32[8,8,30], index: 0, kind: input, shape index: {}]
  %s1 = inlined_call_operand.vmem [shape: f32[1,8,30], index: 1, kind: input, shape index: {}]
  %s2 = inlined_call_operand.vmem [shape: f32[30,60], index: 2, kind: input, shape index: {}]
  %s3 = inlined_call_operand.vmem [shape: f32[1,60], index: 3, kind: input, shape index: {}]
  %s4 = inlined_call_operand.vmem [shape: f32[30,16], index: 4, kind: input, shape index: {}]
  %s5 = inlined_call_operand.vmem [shape: f32[1,16], index: 5, kind: input, shape index: {}]
  %s6 = inlined_call_operand.hbm [shape: f32[8,8,16], index: 6, kind: output, shape index: {}]
  %s7 = sld [smem:[#allocation0]]
  $region61: #{tpu_custom_call.1} parent=0
    _
  %s9 = ssub.s32 1, %s7
  %s10 = scalar_select 0, %s9, %s7
  $region1: #{tpu_custom_call.1} parent=0
    #allocation2 [shape = 'u8[32768]{0}', space=vmem, size = 0x8000, scoped, tag = 'input window, operand 0']
    #allocation3 [shape = 's32[2]{0}', space=sflag, size = 0x8, scoped, tag = 'scoped memory for tpu_custom_call.1']
    #allocation4 [shape = 's32[2]{0}', space=sflag, size = 0x8, scoped, tag = 'scoped memory for tpu_custom_call.1']
    #allocation5 [shape = 'u8[32768]{0}', space=vmem, size = 0x8000, scoped, tag = 'output window, operand 0']
    %11 = vsyncpa [#allocation3], 0
    %s12 = scalar_lea.sflag [#allocation3], 1
    %13 = vsyncpa %s12, 0
    %14 = vsyncpa [#allocation4], 0
    %s15 = scalar_lea.sflag [#allocation4], 1
    %16 = vsyncpa %s15, 0
    loop: start=0, step=1, limit=4
    $region2: #{tpu_custom_call.1} parent=1 // loop_pre_header
      _
    $region3: #{tpu_custom_call.1} parent=1 // loop_header
      %s18 = sphi 0, %s22
      %p19 = scmp.ge.s32.totalorder %s18, 4
      %s28 = sphi 0, %s30
      %s31 = sphi 0, %s28
      %s32 = sphi 0, %s31
      %s48 = sphi 0, %s32
      %s52 = sphi 0, %s52
      %s54 = sphi 0, %s52
      %s55 = sphi 0, %s54
      %s69 = sphi 0, %s55
      %s73 = sphi 0, %s73
      %s75 = sphi 0, %s73
      %s76 = sphi 0, %s75
      %s90 = sphi 0, %s76
      %s94 = sphi 0, %s94
      %s96 = sphi 0, %s94
      %s97 = sphi 0, %s96
      %s111 = sphi 0, %s97
      %s115 = sphi 0, %s115
      %s117 = sphi 0, %s115
      %s118 = sphi 0, %s117
      %s132 = sphi 0, %s118
      %s136 = sphi 0, %s136
      %s138 = sphi 0, %s136
      %s139 = sphi 0, %s138
      %s153 = sphi 0, %s139
      %s159 = sphi 0, %s161
      %s162 = sphi 0, %s159
      %s163 = sphi 0, %s162
      %s179 = sphi 0, %s163
    $region4: #{tpu_custom_call.1} parent=1 // loop_header_branch
      %21 = sbr.rel (%p19) target = $region8
    $region5: #{tpu_custom_call.1} parent=1 // loop_body
      %s23 = ssub.s32 %s18, 1
      %s24 = ssub.s32 %s18, 2
      %s25 = sadd.s32 %s18, 1
      %s26 = ssub.s32 %s18, %s25
      %p27 = scmp.eq.s32.totalorder %s26, 0
      %s29 = sadd.s32 %s28, 1
      %s30 = scalar_select %p27, %s28, %s29
      %p33 = pneg %p27
      %p34 = scmp.eq.s32.totalorder %s18, 1
      %p35 = por %p33, %p34
      %p36 = scmp.ne.s32.totalorder %s28, %s31
      %p37 = scmp.eq.s32.totalorder %s18, 0
      %p38 = por %p36, %p37
      %p39 = scmp.ne.s32.totalorder %s28, %s31
      %p40 = scmp.eq.s32.totalorder %s23, 1
      %p41 = por %p39, %p40
      %p42 = scmp.ne.s32.totalorder %s31, %s32
      %p43 = scmp.eq.s32.totalorder %s23, 0
      %p44 = por %p42, %p43
      %p45 = scmp.ne.s32.totalorder %s31, %s32
      %p46 = scmp.eq.s32.totalorder %s24, 1
      %p47 = por %p45, %p46
      %p49 = scmp.ne.s32.totalorder %s32, %s48
      %p50 = scmp.eq.s32.totalorder %s24, 0
      %p51 = por %p49, %p50
      %s53 = sadd.s32 %s52, 1
      %p56 = scmp.eq.s32.totalorder %s18, 1
      %p57 = scmp.ne.s32.totalorder %s52, %s54
      %p58 = scmp.eq.s32.totalorder %s18, 0
      %p59 = por %p57, %p58
      %p60 = scmp.ne.s32.totalorder %s52, %s54
      %p61 = scmp.eq.s32.totalorder %s23, 1
      %p62 = por %p60, %p61
      %p63 = scmp.ne.s32.totalorder %s54, %s55
      %p64 = scmp.eq.s32.totalorder %s23, 0
      %p65 = por %p63, %p64
      %p66 = scmp.ne.s32.totalorder %s54, %s55
      %p67 = scmp.eq.s32.totalorder %s24, 1
      %p68 = por %p66, %p67
      %p70 = scmp.ne.s32.totalorder %s55, %s69
      %p71 = scmp.eq.s32.totalorder %s24, 0
      %p72 = por %p70, %p71
      %s74 = sadd.s32 %s73, 1
      %p77 = scmp.eq.s32.totalorder %s18, 1
      %p78 = scmp.ne.s32.totalorder %s73, %s75
      %p79 = scmp.eq.s32.totalorder %s18, 0
      %p80 = por %p78, %p79
      %p81 = scmp.ne.s32.totalorder %s73, %s75
      %p82 = scmp.eq.s32.totalorder %s23, 1
      %p83 = por %p81, %p82
      %p84 = scmp.ne.s32.totalorder %s75, %s76
      %p85 = scmp.eq.s32.totalorder %s23, 0
      %p86 = por %p84, %p85
      %p87 = scmp.ne.s32.totalorder %s75, %s76
      %p88 = scmp.eq.s32.totalorder %s24, 1
      %p89 = por %p87, %p88
      %p91 = scmp.ne.s32.totalorder %s76, %s90
      %p92 = scmp.eq.s32.totalorder %s24, 0
      %p93 = por %p91, %p92
      %s95 = sadd.s32 %s94, 1
      %p98 = scmp.eq.s32.totalorder %s18, 1
      %p99 = scmp.ne.s32.totalorder %s94, %s96
      %p100 = scmp.eq.s32.totalorder %s18, 0
      %p101 = por %p99, %p100
      %p102 = scmp.ne.s32.totalorder %s94, %s96
      %p103 = scmp.eq.s32.totalorder %s23, 1
      %p104 = por %p102, %p103
      %p105 = scmp.ne.s32.totalorder %s96, %s97
      %p106 = scmp.eq.s32.totalorder %s23, 0
      %p107 = por %p105, %p106
      %p108 = scmp.ne.s32.totalorder %s96, %s97
      %p109 = scmp.eq.s32.totalorder %s24, 1
      %p110 = por %p108, %p109
      %p112 = scmp.ne.s32.totalorder %s97, %s111
      %p113 = scmp.eq.s32.totalorder %s24, 0
      %p114 = por %p112, %p113
      %s116 = sadd.s32 %s115, 1
      %p119 = scmp.eq.s32.totalorder %s18, 1
      %p120 = scmp.ne.s32.totalorder %s115, %s117
      %p121 = scmp.eq.s32.totalorder %s18, 0
      %p122 = por %p120, %p121
      %p123 = scmp.ne.s32.totalorder %s115, %s117
      %p124 = scmp.eq.s32.totalorder %s23, 1
      %p125 = por %p123, %p124
      %p126 = scmp.ne.s32.totalorder %s117, %s118
      %p127 = scmp.eq.s32.totalorder %s23, 0
      %p128 = por %p126, %p127
      %p129 = scmp.ne.s32.totalorder %s117, %s118
      %p130 = scmp.eq.s32.totalorder %s24, 1
      %p131 = por %p129, %p130
      %p133 = scmp.ne.s32.totalorder %s118, %s132
      %p134 = scmp.eq.s32.totalorder %s24, 0
      %p135 = por %p133, %p134
      %s137 = sadd.s32 %s136, 1
      %p140 = scmp.eq.s32.totalorder %s18, 1
      %p141 = scmp.ne.s32.totalorder %s136, %s138
      %p142 = scmp.eq.s32.totalorder %s18, 0
      %p143 = por %p141, %p142
      %p144 = scmp.ne.s32.totalorder %s136, %s138
      %p145 = scmp.eq.s32.totalorder %s23, 1
      %p146 = por %p144, %p145
      %p147 = scmp.ne.s32.totalorder %s138, %s139
      %p148 = scmp.eq.s32.totalorder %s23, 0
      %p149 = por %p147, %p148
      %p150 = scmp.ne.s32.totalorder %s138, %s139
      %p151 = scmp.eq.s32.totalorder %s24, 1
      %p152 = por %p150, %p151
      %p154 = scmp.ne.s32.totalorder %s139, %s153
      %p155 = scmp.eq.s32.totalorder %s24, 0
      %p156 = por %p154, %p155
      %s157 = ssub.s32 %s18, %s25
      %p158 = scmp.eq.s32.totalorder %s157, 0
      %s160 = sadd.s32 %s159, 1
      %s161 = scalar_select %p158, %s159, %s160
      %p164 = pneg %p158
      %p165 = scmp.eq.s32.totalorder %s18, 1
      %p166 = por %p164, %p165
      %p167 = scmp.ne.s32.totalorder %s159, %s162
      %p168 = scmp.eq.s32.totalorder %s18, 0
      %p169 = por %p167, %p168
      %p170 = scmp.ne.s32.totalorder %s159, %s162
      %p171 = scmp.eq.s32.totalorder %s23, 1
      %p172 = por %p170, %p171
      %p173 = scmp.ne.s32.totalorder %s162, %s163
      %p174 = scmp.eq.s32.totalorder %s23, 0
      %p175 = por %p173, %p174
      %p176 = scmp.ne.s32.totalorder %s162, %s163
      %p177 = scmp.eq.s32.totalorder %s24, 1
      %p178 = por %p176, %p177
      %p180 = scmp.ne.s32.totalorder %s163, %s179
      %p181 = scmp.eq.s32.totalorder %s24, 0
      %p182 = por %p180, %p181
      %p183 = scmp.le.s32.totalorder 1, %s18
      %p184 = scmp.lt.s32.totalorder %s18, 3
      %p185 = pnand %p183, %p184
      %p186 = pneg %p185
      // Predicated region
      $region9: #{tpu_custom_call.1} parent=5 // pred_check
        _
      $region10: #{tpu_custom_call.1} parent=5 // pred_check_branch
        %188 = sbr.rel (%p185) target = $region12
      $region11: #{tpu_custom_call.1} parent=5 // pred_region
        %s189 = ssub.s32 %s18, 1
        // Predicated region
        $region13: #{tpu_custom_call.1} parent=11 // pred_check
          %p190 = pneg %p65
        $region14: #{tpu_custom_call.1} parent=11 // pred_check_branch
          %192 = sbr.rel (%p190) target = $region16
        $region15: #{tpu_custom_call.1} parent=11 // pred_region
          _
        $region16: #{tpu_custom_call.1} parent=11 // pred_fallthru
          _
        // Predicated region
        $region17: #{tpu_custom_call.1} parent=11 // pred_check
          %p193 = pneg %p86
        $region18: #{tpu_custom_call.1} parent=11 // pred_check_branch
          %195 = sbr.rel (%p193) target = $region20
        $region19: #{tpu_custom_call.1} parent=11 // pred_region
          _
        $region20: #{tpu_custom_call.1} parent=11 // pred_fallthru
          _
        // Predicated region
        $region21: #{tpu_custom_call.1} parent=11 // pred_check
          %p196 = pneg %p107
        $region22: #{tpu_custom_call.1} parent=11 // pred_check_branch
          %198 = sbr.rel (%p196) target = $region24
        $region23: #{tpu_custom_call.1} parent=11 // pred_region
          _
        $region24: #{tpu_custom_call.1} parent=11 // pred_fallthru
          _
        // Predicated region
        $region25: #{tpu_custom_call.1} parent=11 // pred_check
          %p199 = pneg %p128
        $region26: #{tpu_custom_call.1} parent=11 // pred_check_branch
          %201 = sbr.rel (%p199) target = $region28
        $region27: #{tpu_custom_call.1} parent=11 // pred_region
          _
        $region28: #{tpu_custom_call.1} parent=11 // pred_fallthru
          _
        // Predicated region
        $region29: #{tpu_custom_call.1} parent=11 // pred_check
          %p202 = pneg %p149
        $region30: #{tpu_custom_call.1} parent=11 // pred_check_branch
          %204 = sbr.rel (%p202) target = $region32
        $region31: #{tpu_custom_call.1} parent=11 // pred_region
          _
        $region32: #{tpu_custom_call.1} parent=11 // pred_fallthru
          _
      $region12: #{tpu_custom_call.1} parent=5 // pred_fallthru
        _
      %p205 = scmp.lt.s32.totalorder %s18, 2
      // Predicated region
      $region33: #{tpu_custom_call.1} parent=5 // pred_check
        %p206 = pneg %p205
      $region34: #{tpu_custom_call.1} parent=5 // pred_check_branch
        %208 = sbr.rel (%p206) target = $region36
      $region35: #{tpu_custom_call.1} parent=5 // pred_region
        // Predicated region
        $region37: #{tpu_custom_call.1} parent=35 // pred_check
          %p209 = pneg %p38
        $region38: #{tpu_custom_call.1} parent=35 // pred_check_branch
          %211 = sbr.rel (%p209) target = $region40
        $region39: #{tpu_custom_call.1} parent=35 // pred_region
          %s212 = sand.u32 %s28, 1
          %s213 = scalar_lea.sflag [#allocation3], %s212
          %s214 = sand.u32 %s28, 1
          %s215 = smul.addr %s214, 32
          %s216 = scalar_lea.vmem [#allocation2], %s215
          %s217 = smul.u32 4, %s18
          %s219 = ssub.s32 512, 512
          %220 = vsyncadd %s213, %s219
          %s221 = smul.addr %s217, 128
          %s222 = scalar_lea.hbm %s0, %s221
          %s223 = sshll.u32 %s216, 4
          %s224 = int_to_ptr.vmem [resolvable:$true] %s223
          %229 = dma.hbm_to_vmem [thread:$0]  %s222, 512, %s224, %s213, 128, 128, 8
        $region40: #{tpu_custom_call.1} parent=35 // pred_fallthru
          _
      $region36: #{tpu_custom_call.1} parent=5 // pred_fallthru
        _
      %p230 = scmp.le.s32.totalorder 1, %s18
      %p231 = scmp.lt.s32.totalorder %s18, 3
      %p232 = pnand %p230, %p231
      %p233 = pneg %p232
      // Predicated region
      $region41: #{tpu_custom_call.1} parent=5 // pred_check
        _
      $region42: #{tpu_custom_call.1} parent=5 // pred_check_branch
        %235 = sbr.rel (%p232) target = $region44
      $region43: #{tpu_custom_call.1} parent=5 // pred_region
        %s236 = ssub.s32 %s18, 1
        %s237 = sand.u32 %s31, 1
        %s238 = scalar_lea.sflag [#allocation3], %s237
        %s239 = sand.u32 %s31, 1
        %s240 = smul.addr %s239, 32
        %s241 = scalar_lea.vmem [#allocation2], %s240
        // Predicated region
        $region45: #{tpu_custom_call.1} parent=43 // pred_check
          %p242 = pneg %p44
        $region46: #{tpu_custom_call.1} parent=43 // pred_check_branch
          %244 = sbr.rel (%p242) target = $region48
        $region47: #{tpu_custom_call.1} parent=43 // pred_region
          %245 = dma.done %s238, 512
        $region48: #{tpu_custom_call.1} parent=43 // pred_fallthru
          _
        %s246 = sand.u32 %s31, 1
        %s247 = scalar_lea.sflag [#allocation3], %s246
        %s248 = sand.u32 %s31, 1
        %s249 = smul.addr %s248, 32
        %s250 = scalar_lea.vmem [#allocation2], %s249
        %p251 = pneg %p44
        %p252 = pneg %p41
        %p253 = pneg %p65
        %p254 = pneg %p62
        %p255 = pneg %p86
        %p256 = pneg %p83
        %p257 = pneg %p107
        %p258 = pneg %p104
        %p259 = pneg %p128
        %p260 = pneg %p125
        %p261 = pneg %p149
        %p262 = pneg %p146
        %p263 = pneg %p175
        %p264 = pneg %p172
        %s265 = sand.u32 %s162, 1
        %s266 = scalar_lea.sflag [#allocation4], %s265
        %s267 = sand.u32 %s162, 1
        %s268 = smul.addr %s267, 32
        %s269 = scalar_lea.vmem [#allocation5], %s268
        %s270 = smul.u32 4, %s23
        %s271 = smul.u32 4, %s23
        %v272 = vld [vmem:[%s241] sm:$0xff]
        %v273 = vld [vmem:[%s241 + $0x8] sm:$0xff]
        %v274 = vld [vmem:[%s241 + $0x10] sm:$0xff]
        %v275 = vld [vmem:[%s241 + $0x18] sm:$0xff]
        %v276 = vld [vmem:[%s1] sm:$0xff]
        %v277 = vadd.f32 %v272, %v276
        %v278 = vadd.f32 %v273, %v276
        %v279 = vadd.f32 %v274, %v276
        %v280 = vadd.f32 %v275, %v276
        %v281 = vld [vmem:[%s2] sm:$0xff]
        %v282 = vld [vmem:[%s2 + $0x8] sm:$0xff]
        %v283 = vld [vmem:[%s2 + $0x10] sm:$0xff]
        %v284 = vld [vmem:[%s2 + $0x18] sm:$0x3f]
        %v285 = vld [vmem:[%s3] sm:$0x1]
        %v287 = vlaneseq
        %v288 = vshrl.u32 %v287, 7
        %v289 = vsub.s32 0, %v288
        %v290 = vrot.slane %v285, %v289
        %vm292 = vcmask 244736
        %v294 = vsel %vm292, %v277, 0
        %v297 = vsel %vm292, %v278, 0
        %v300 = vsel %vm292, %v279, 0
        %v303 = vsel %vm292, %v280, 0
        %vm305 = vcmask 1045504
        %v307 = vsel %vm305, %v284, 0
        %309 = vmatprep.subr.mxu0 0.0
        %310 = vmatpush1.msra.mxu0 %v281
        %311 = vmatprep.subr.mxu0 0.0
        %312 = vmatpush1.msra.mxu0 %v282
        %313 = vmatprep.subr.mxu0 0.0
        %314 = vmatpush1.msra.mxu0 %v283
        %315 = vmatprep.subr.mxu0 0.0
        %316 = vmatpush1.msra.mxu0 %v307
        %317 = vmatprep.subr.mxu0 0.0
        %318 = vmatpush1.msra.mxu0 0.0
        %319 = vmatprep.subr.mxu0 0.0
        %320 = vmatpush1.msra.mxu0 0.0
        %321 = vmatprep.subr.mxu0 0.0
        %322 = vmatpush1.msra.mxu0 0.0
        %323 = vmatprep.subr.mxu0 0.0
        %324 = vmatpush1.msra.mxu0 0.0
        %325 = vmatprep.subr.mxu0 0.0
        %326 = vmatpush1.msra.mxu0 0.0
        %327 = vmatprep.subr.mxu0 0.0
        %328 = vmatpush1.msra.mxu0 0.0
        %329 = vmatprep.subr.mxu0 0.0
        %330 = vmatpush1.msra.mxu0 0.0
        %331 = vmatprep.subr.mxu0 0.0
        %332 = vmatpush1.msra.mxu0 0.0
        %333 = vmatprep.subr.mxu0 0.0
        %334 = vmatpush1.msra.mxu0 0.0
        %335 = vmatprep.subr.mxu0 0.0
        %336 = vmatpush1.msra.mxu0 0.0
        %337 = vmatprep.subr.mxu0 0.0
        %338 = vmatpush1.msra.mxu0 0.0
        %339 = vmatprep.subr.mxu0 0.0
        %340 = vmatpush1.msra.mxu0 0.0
        %341 = vmatprep.subr.mxu0 0.0
        %342 = vmatpush1.msra.mxu0 0.0
        %343 = vmatprep.subr.mxu0 0.0
        %344 = vmatpush1.msra.mxu0 0.0
        %345 = vmatprep.subr.mxu0 0.0
        %346 = vmatpush1.msra.mxu0 0.0
        %347 = vmatprep.subr.mxu0 0.0
        %348 = vmatpush1.msra.mxu0 0.0
        %349 = vmatprep.subr.mxu0 0.0
        %350 = vmatpush1.msra.mxu0 0.0
        %351 = vmatprep.subr.mxu0 0.0
        %352 = vmatpush1.msra.mxu0 0.0
        %353 = vmatprep.subr.mxu0 0.0
        %354 = vmatpush1.msra.mxu0 0.0
        %355 = vmatprep.subr.mxu0 0.0
        %356 = vmatpush1.msra.mxu0 0.0
        %357 = vmatprep.subr.mxu0 0.0
        %358 = vmatpush1.msra.mxu0 0.0
        %359 = vmatprep.subr.mxu0 0.0
        %360 = vmatpush1.msra.mxu0 0.0
        %361 = vmatprep.subr.mxu0 0.0
        %362 = vmatpush1.msra.mxu0 0.0
        %363 = vmatprep.subr.mxu0 0.0
        %364 = vmatpush1.msra.mxu0 0.0
        %365 = vmatprep.subr.mxu0 0.0
        %366 = vmatpush1.msra.mxu0 0.0
        %367 = vmatprep.subr.mxu0 0.0
        %368 = vmatpush1.msra.mxu0 0.0
        %369 = vmatprep.subr.mxu0 0.0
        %370 = vmatpush1.msra.mxu0 0.0
        %371 = vmatprep.subr.mxu0 0.0
        %372 = vmatpush1.msra.mxu0 0.0
        %373 = vmatprep.mubr.f32.mxu0 0.0
        %374 = vmatmul.mubr.f32.gmra.mrb[0].mxu0 %v294
        %v375 = vpop.f32.mrb[0].mxu0
        %v376 = vadd.f32 %v290, %v375
        %v377 = vpop.f32.mrb[0].mxu0
        %378 = vmatprep.mubr.f32.mxu0 0.0
        %379 = vmatmul.mubr.f32.gmra.mrb[0].mxu0 %v297
        %v380 = vpop.f32.mrb[0].mxu0
        %v381 = vadd.f32 %v290, %v380
        %v382 = vpop.f32.mrb[0].mxu0
        %383 = vmatprep.mubr.f32.mxu0 0.0
        %384 = vmatmul.mubr.f32.gmra.mrb[0].mxu0 %v300
        %v385 = vpop.f32.mrb[0].mxu0
        %v386 = vadd.f32 %v290, %v385
        %v387 = vpop.f32.mrb[0].mxu0
        %388 = vmatprep.mubr.f32.mxu0 0.0
        %389 = vmatmul.mubr.f32.gmra.mrb[0].mxu0 %v303
        %v390 = vpop.f32.mrb[0].mxu0
        %v391 = vadd.f32 %v290, %v390
        %v392 = vpop.f32.mrb[0].mxu0
        %393 = vdwg.mxu0
        %395 = vrot.lane.b32.xlu0 %v376, 98
        %v396 = vpop.permute.xlu0 %395
        %v397 = vsel %vm292, %v376, 0
        %v399 = vsel %vm292, %v396, 0
        %401 = vmatprep.subr.mxu0 0.0
        %402 = vmatpush1.xpose.msra.mxu0 %v399
        %403 = vmatprep.subr.mxu0 0.0
        %404 = vmatpush1.xpose.msra.mxu0 0.0
        %405 = vmatprep.subr.mxu0 0.0
        %406 = vmatpush1.xpose.msra.mxu0 0.0
        %407 = vmatprep.subr.mxu0 0.0
        %408 = vmatpush1.xpose.msra.mxu0 0.0
        %409 = vmatprep.subr.mxu0 0.0
        %410 = vmatpush1.xpose.msra.mxu0 0.0
        %411 = vmatprep.subr.mxu0 0.0
        %412 = vmatpush1.xpose.msra.mxu0 0.0
        %413 = vmatprep.subr.mxu0 0.0
        %414 = vmatpush1.xpose.msra.mxu0 0.0
        %415 = vmatprep.subr.mxu0 0.0
        %416 = vmatpush1.xpose.msra.mxu0 0.0
        %417 = vmatprep.subr.mxu0 0.0
        %418 = vmatpush1.xpose.msra.mxu0 0.0
        %419 = vmatprep.subr.mxu0 0.0
        %420 = vmatpush1.xpose.msra.mxu0 0.0
        %421 = vmatprep.subr.mxu0 0.0
        %422 = vmatpush1.xpose.msra.mxu0 0.0
        %423 = vmatprep.subr.mxu0 0.0
        %424 = vmatpush1.xpose.msra.mxu0 0.0
        %425 = vmatprep.subr.mxu0 0.0
        %426 = vmatpush1.xpose.msra.mxu0 0.0
        %427 = vmatprep.subr.mxu0 0.0
        %428 = vmatpush1.xpose.msra.mxu0 0.0
        %429 = vmatprep.subr.mxu0 0.0
        %430 = vmatpush1.xpose.msra.mxu0 0.0
        %431 = vmatprep.subr.mxu0 0.0
        %432 = vmatpush1.xpose.msra.mxu0 0.0
        %433 = vmatprep.subr.mxu0 0.0
        %434 = vmatpush1.xpose.msra.mxu0 0.0
        %435 = vmatprep.subr.mxu0 0.0
        %436 = vmatpush1.xpose.msra.mxu0 0.0
        %437 = vmatprep.subr.mxu0 0.0
        %438 = vmatpush1.xpose.msra.mxu0 0.0
        %439 = vmatprep.subr.mxu0 0.0
        %440 = vmatpush1.xpose.msra.mxu0 0.0
        %441 = vmatprep.subr.mxu0 0.0
        %442 = vmatpush1.xpose.msra.mxu0 0.0
        %443 = vmatprep.subr.mxu0 0.0
        %444 = vmatpush1.xpose.msra.mxu0 0.0
        %445 = vmatprep.subr.mxu0 0.0
        %446 = vmatpush1.xpose.msra.mxu0 0.0
        %447 = vmatprep.subr.mxu0 0.0
        %448 = vmatpush1.xpose.msra.mxu0 0.0
        %449 = vmatprep.subr.mxu0 0.0
        %450 = vmatpush1.xpose.msra.mxu0 0.0
        %451 = vmatprep.subr.mxu0 0.0
        %452 = vmatpush1.xpose.msra.mxu0 0.0
        %453 = vmatprep.subr.mxu0 0.0
        %454 = vmatpush1.xpose.msra.mxu0 0.0
        %455 = vmatprep.subr.mxu0 0.0
        %456 = vmatpush1.xpose.msra.mxu0 0.0
        %457 = vmatprep.subr.mxu0 0.0
        %458 = vmatpush1.xpose.msra.mxu0 0.0
        %459 = vmatprep.subr.mxu0 0.0
        %460 = vmatpush1.xpose.msra.mxu0 0.0
        %461 = vmatprep.subr.mxu0 0.0
        %462 = vmatpush1.xpose.msra.mxu0 0.0
        %463 = vmatprep.subr.mxu0 0.0
        %464 = vmatpush1.xpose.msra.mxu0 0.0
        %465 = vmatprep.mubr.f32.mxu0 0.0
        %466 = vmatmul.mubr.f32.gmra.mrb[0].mxu0 %v397
        %v467 = vpop.f32.mrb[0].mxu0
        %v468 = vadd.f32 0.0, %v467
        %v469 = vpop.f32.mrb[0].mxu0
        %470 = vdwg.mxu0
        %472 = vrot.lane.b32.xlu0 %v381, 98
        %v473 = vpop.permute.xlu0 %472
        %v474 = vsel %vm292, %v381, 0
        %v476 = vsel %vm292, %v473, 0
        %478 = vmatprep.subr.mxu0 0.0
        %479 = vmatpush1.xpose.msra.mxu0 %v476
        %480 = vmatprep.subr.mxu0 0.0
        %481 = vmatpush1.xpose.msra.mxu0 0.0
        %482 = vmatprep.subr.mxu0 0.0
        %483 = vmatpush1.xpose.msra.mxu0 0.0
        %484 = vmatprep.subr.mxu0 0.0
        %485 = vmatpush1.xpose.msra.mxu0 0.0
        %486 = vmatprep.subr.mxu0 0.0
        %487 = vmatpush1.xpose.msra.mxu0 0.0
        %488 = vmatprep.subr.mxu0 0.0
        %489 = vmatpush1.xpose.msra.mxu0 0.0
        %490 = vmatprep.subr.mxu0 0.0
        %491 = vmatpush1.xpose.msra.mxu0 0.0
        %492 = vmatprep.subr.mxu0 0.0
        %493 = vmatpush1.xpose.msra.mxu0 0.0
        %494 = vmatprep.subr.mxu0 0.0
        %495 = vmatpush1.xpose.msra.mxu0 0.0
        %496 = vmatprep.subr.mxu0 0.0
        %497 = vmatpush1.xpose.msra.mxu0 0.0
        %498 = vmatprep.subr.mxu0 0.0
        %499 = vmatpush1.xpose.msra.mxu0 0.0
        %500 = vmatprep.subr.mxu0 0.0
        %501 = vmatpush1.xpose.msra.mxu0 0.0
        %502 = vmatprep.subr.mxu0 0.0
        %503 = vmatpush1.xpose.msra.mxu0 0.0
        %504 = vmatprep.subr.mxu0 0.0
        %505 = vmatpush1.xpose.msra.mxu0 0.0
        %506 = vmatprep.subr.mxu0 0.0
        %507 = vmatpush1.xpose.msra.mxu0 0.0
        %508 = vmatprep.subr.mxu0 0.0
        %509 = vmatpush1.xpose.msra.mxu0 0.0
        %510 = vmatprep.subr.mxu0 0.0
        %511 = vmatpush1.xpose.msra.mxu0 0.0
        %512 = vmatprep.subr.mxu0 0.0
        %513 = vmatpush1.xpose.msra.mxu0 0.0
        %514 = vmatprep.subr.mxu0 0.0
        %515 = vmatpush1.xpose.msra.mxu0 0.0
        %516 = vmatprep.subr.mxu0 0.0
        %517 = vmatpush1.xpose.msra.mxu0 0.0
        %518 = vmatprep.subr.mxu0 0.0
        %519 = vmatpush1.xpose.msra.mxu0 0.0
        %520 = vmatprep.subr.mxu0 0.0
        %521 = vmatpush1.xpose.msra.mxu0 0.0
        %522 = vmatprep.subr.mxu0 0.0
        %523 = vmatpush1.xpose.msra.mxu0 0.0
        %524 = vmatprep.subr.mxu0 0.0
        %525 = vmatpush1.xpose.msra.mxu0 0.0
        %526 = vmatprep.subr.mxu0 0.0
        %527 = vmatpush1.xpose.msra.mxu0 0.0
        %528 = vmatprep.subr.mxu0 0.0
        %529 = vmatpush1.xpose.msra.mxu0 0.0
        %530 = vmatprep.subr.mxu0 0.0
        %531 = vmatpush1.xpose.msra.mxu0 0.0
        %532 = vmatprep.subr.mxu0 0.0
        %533 = vmatpush1.xpose.msra.mxu0 0.0
        %534 = vmatprep.subr.mxu0 0.0
        %535 = vmatpush1.xpose.msra.mxu0 0.0
        %536 = vmatprep.subr.mxu0 0.0
        %537 = vmatpush1.xpose.msra.mxu0 0.0
        %538 = vmatprep.subr.mxu0 0.0
        %539 = vmatpush1.xpose.msra.mxu0 0.0
        %540 = vmatprep.subr.mxu0 0.0
        %541 = vmatpush1.xpose.msra.mxu0 0.0
        %542 = vmatprep.mubr.f32.mxu0 0.0
        %543 = vmatmul.mubr.f32.gmra.mrb[0].mxu0 %v474
        %v544 = vpop.f32.mrb[0].mxu0
        %v545 = vadd.f32 0.0, %v544
        %v546 = vpop.f32.mrb[0].mxu0
        %547 = vdwg.mxu0
        %549 = vrot.lane.b32.xlu0 %v386, 98
        %v550 = vpop.permute.xlu0 %549
        %v551 = vsel %vm292, %v386, 0
        %v553 = vsel %vm292, %v550, 0
        %555 = vmatprep.subr.mxu0 0.0
        %556 = vmatpush1.xpose.msra.mxu0 %v553
        %557 = vmatprep.subr.mxu0 0.0
        %558 = vmatpush1.xpose.msra.mxu0 0.0
        %559 = vmatprep.subr.mxu0 0.0
        %560 = vmatpush1.xpose.msra.mxu0 0.0
        %561 = vmatprep.subr.mxu0 0.0
        %562 = vmatpush1.xpose.msra.mxu0 0.0
        %563 = vmatprep.subr.mxu0 0.0
        %564 = vmatpush1.xpose.msra.mxu0 0.0
        %565 = vmatprep.subr.mxu0 0.0
        %566 = vmatpush1.xpose.msra.mxu0 0.0
        %567 = vmatprep.subr.mxu0 0.0
        %568 = vmatpush1.xpose.msra.mxu0 0.0
        %569 = vmatprep.subr.mxu0 0.0
        %570 = vmatpush1.xpose.msra.mxu0 0.0
        %571 = vmatprep.subr.mxu0 0.0
        %572 = vmatpush1.xpose.msra.mxu0 0.0
        %573 = vmatprep.subr.mxu0 0.0
        %574 = vmatpush1.xpose.msra.mxu0 0.0
        %575 = vmatprep.subr.mxu0 0.0
        %576 = vmatpush1.xpose.msra.mxu0 0.0
        %577 = vmatprep.subr.mxu0 0.0
        %578 = vmatpush1.xpose.msra.mxu0 0.0
        %579 = vmatprep.subr.mxu0 0.0
        %580 = vmatpush1.xpose.msra.mxu0 0.0
        %581 = vmatprep.subr.mxu0 0.0
        %582 = vmatpush1.xpose.msra.mxu0 0.0
        %583 = vmatprep.subr.mxu0 0.0
        %584 = vmatpush1.xpose.msra.mxu0 0.0
        %585 = vmatprep.subr.mxu0 0.0
        %586 = vmatpush1.xpose.msra.mxu0 0.0
        %587 = vmatprep.subr.mxu0 0.0
        %588 = vmatpush1.xpose.msra.mxu0 0.0
        %589 = vmatprep.subr.mxu0 0.0
        %590 = vmatpush1.xpose.msra.mxu0 0.0
        %591 = vmatprep.subr.mxu0 0.0
        %592 = vmatpush1.xpose.msra.mxu0 0.0
        %593 = vmatprep.subr.mxu0 0.0
        %594 = vmatpush1.xpose.msra.mxu0 0.0
        %595 = vmatprep.subr.mxu0 0.0
        %596 = vmatpush1.xpose.msra.mxu0 0.0
        %597 = vmatprep.subr.mxu0 0.0
        %598 = vmatpush1.xpose.msra.mxu0 0.0
        %599 = vmatprep.subr.mxu0 0.0
        %600 = vmatpush1.xpose.msra.mxu0 0.0
        %601 = vmatprep.subr.mxu0 0.0
        %602 = vmatpush1.xpose.msra.mxu0 0.0
        %603 = vmatprep.subr.mxu0 0.0
        %604 = vmatpush1.xpose.msra.mxu0 0.0
        %605 = vmatprep.subr.mxu0 0.0
        %606 = vmatpush1.xpose.msra.mxu0 0.0
        %607 = vmatprep.subr.mxu0 0.0
        %608 = vmatpush1.xpose.msra.mxu0 0.0
        %609 = vmatprep.subr.mxu0 0.0
        %610 = vmatpush1.xpose.msra.mxu0 0.0
        %611 = vmatprep.subr.mxu0 0.0
        %612 = vmatpush1.xpose.msra.mxu0 0.0
        %613 = vmatprep.subr.mxu0 0.0
        %614 = vmatpush1.xpose.msra.mxu0 0.0
        %615 = vmatprep.subr.mxu0 0.0
        %616 = vmatpush1.xpose.msra.mxu0 0.0
        %617 = vmatprep.subr.mxu0 0.0
        %618 = vmatpush1.xpose.msra.mxu0 0.0
        %619 = vmatprep.mubr.f32.mxu0 0.0
        %620 = vmatmul.mubr.f32.gmra.mrb[0].mxu0 %v551
        %v621 = vpop.f32.mrb[0].mxu0
        %v622 = vadd.f32 0.0, %v621
        %v623 = vpop.f32.mrb[0].mxu0
        %624 = vdwg.mxu0
        %626 = vrot.lane.b32.xlu0 %v391, 98
        %v627 = vpop.permute.xlu0 %626
        %v628 = vsel %vm292, %v391, 0
        %v630 = vsel %vm292, %v627, 0
        %632 = vmatprep.subr.mxu0 0.0
        %633 = vmatpush1.xpose.msra.mxu0 %v630
        %634 = vmatprep.subr.mxu0 0.0
        %635 = vmatpush1.xpose.msra.mxu0 0.0
        %636 = vmatprep.subr.mxu0 0.0
        %637 = vmatpush1.xpose.msra.mxu0 0.0
        %638 = vmatprep.subr.mxu0 0.0
        %639 = vmatpush1.xpose.msra.mxu0 0.0
        %640 = vmatprep.subr.mxu0 0.0
        %641 = vmatpush1.xpose.msra.mxu0 0.0
        %642 = vmatprep.subr.mxu0 0.0
        %643 = vmatpush1.xpose.msra.mxu0 0.0
        %644 = vmatprep.subr.mxu0 0.0
        %645 = vmatpush1.xpose.msra.mxu0 0.0
        %646 = vmatprep.subr.mxu0 0.0
        %647 = vmatpush1.xpose.msra.mxu0 0.0
        %648 = vmatprep.subr.mxu0 0.0
        %649 = vmatpush1.xpose.msra.mxu0 0.0
        %650 = vmatprep.subr.mxu0 0.0
        %651 = vmatpush1.xpose.msra.mxu0 0.0
        %652 = vmatprep.subr.mxu0 0.0
        %653 = vmatpush1.xpose.msra.mxu0 0.0
        %654 = vmatprep.subr.mxu0 0.0
        %655 = vmatpush1.xpose.msra.mxu0 0.0
        %656 = vmatprep.subr.mxu0 0.0
        %657 = vmatpush1.xpose.msra.mxu0 0.0
        %658 = vmatprep.subr.mxu0 0.0
        %659 = vmatpush1.xpose.msra.mxu0 0.0
        %660 = vmatprep.subr.mxu0 0.0
        %661 = vmatpush1.xpose.msra.mxu0 0.0
        %662 = vmatprep.subr.mxu0 0.0
        %663 = vmatpush1.xpose.msra.mxu0 0.0
        %664 = vmatprep.subr.mxu0 0.0
        %665 = vmatpush1.xpose.msra.mxu0 0.0
        %666 = vmatprep.subr.mxu0 0.0
        %667 = vmatpush1.xpose.msra.mxu0 0.0
        %668 = vmatprep.subr.mxu0 0.0
        %669 = vmatpush1.xpose.msra.mxu0 0.0
        %670 = vmatprep.subr.mxu0 0.0
        %671 = vmatpush1.xpose.msra.mxu0 0.0
        %672 = vmatprep.subr.mxu0 0.0
        %673 = vmatpush1.xpose.msra.mxu0 0.0
        %674 = vmatprep.subr.mxu0 0.0
        %675 = vmatpush1.xpose.msra.mxu0 0.0
        %676 = vmatprep.subr.mxu0 0.0
        %677 = vmatpush1.xpose.msra.mxu0 0.0
        %678 = vmatprep.subr.mxu0 0.0
        %679 = vmatpush1.xpose.msra.mxu0 0.0
        %680 = vmatprep.subr.mxu0 0.0
        %681 = vmatpush1.xpose.msra.mxu0 0.0
        %682 = vmatprep.subr.mxu0 0.0
        %683 = vmatpush1.xpose.msra.mxu0 0.0
        %684 = vmatprep.subr.mxu0 0.0
        %685 = vmatpush1.xpose.msra.mxu0 0.0
        %686 = vmatprep.subr.mxu0 0.0
        %687 = vmatpush1.xpose.msra.mxu0 0.0
        %688 = vmatprep.subr.mxu0 0.0
        %689 = vmatpush1.xpose.msra.mxu0 0.0
        %690 = vmatprep.subr.mxu0 0.0
        %691 = vmatpush1.xpose.msra.mxu0 0.0
        %692 = vmatprep.subr.mxu0 0.0
        %693 = vmatpush1.xpose.msra.mxu0 0.0
        %694 = vmatprep.subr.mxu0 0.0
        %695 = vmatpush1.xpose.msra.mxu0 0.0
        %696 = vmatprep.mubr.f32.mxu0 0.0
        %697 = vmatmul.mubr.f32.gmra.mrb[0].mxu0 %v628
        %v698 = vpop.f32.mrb[0].mxu0
        %v699 = vadd.f32 0.0, %v698
        %v700 = vpop.f32.mrb[0].mxu0
        %701 = vdwg.mxu0
        %v702 = vmul.f32 %v468, 0.4472136
        %v703 = vmul.f32 %v545, 0.4472136
        %v704 = vmul.f32 %v622, 0.4472136
        %v705 = vmul.f32 %v699, 0.4472136
        %vm706 = vcmask 64512
        %v707 = vsel %vm706, %v702, -inf
        %708 = vmax.xlane.f32.xlu0 %v707
        %v709 = vpop.xlane.xlu0 %708
        %v710 = vsel %vm706, %v703, -inf
        %711 = vmax.xlane.f32.xlu0 %v710
        %v712 = vpop.xlane.xlu0 %711
        %v713 = vsel %vm706, %v704, -inf
        %714 = vmax.xlane.f32.xlu0 %v713
        %v715 = vpop.xlane.xlu0 %714
        %v716 = vsel %vm706, %v705, -inf
        %717 = vmax.xlane.f32.xlu0 %v716
        %v718 = vpop.xlane.xlu0 %717
        %vm719 = vcmp.ge.f32.partialorder %v702, %v709
        %vm720 = vcmp.ge.f32.partialorder %v703, %v712
        %vm721 = vcmp.ge.f32.partialorder %v704, %v715
        %vm722 = vcmp.ge.f32.partialorder %v705, %v718
        %v723 = vsel %vm719, 1, 0
        %v724 = vsel %vm720, 1, 0
        %v725 = vsel %vm721, 1, 0
        %v726 = vsel %vm722, 1, 0
        %v727 = vcvt.s32.f32 %v723
        %v728 = vcvt.s32.f32 %v724
        %v729 = vcvt.s32.f32 %v725
        %v730 = vcvt.s32.f32 %v726
        %v732 = vsel %vm706, %v727, 0
        %v735 = vsel %vm706, %v728, 0
        %v738 = vsel %vm706, %v729, 0
        %v741 = vsel %vm706, %v730, 0
        %743 = vmatprep.subr.mxu0 0.0
        %744 = vmatpush1.msra.mxu0 1.0
        %745 = vmatprep.subr.mxu0 0.0
        %746 = vmatpush1.msra.mxu0 0.0
        %747 = vmatprep.subr.mxu0 0.0
        %748 = vmatpush1.msra.mxu0 0.0
        %749 = vmatprep.subr.mxu0 0.0
        %750 = vmatpush1.msra.mxu0 0.0
        %751 = vmatprep.subr.mxu0 0.0
        %752 = vmatpush1.msra.mxu0 0.0
        %753 = vmatprep.subr.mxu0 0.0
        %754 = vmatpush1.msra.mxu0 0.0
        %755 = vmatprep.subr.mxu0 0.0
        %756 = vmatpush1.msra.mxu0 0.0
        %757 = vmatprep.subr.mxu0 0.0
        %758 = vmatpush1.msra.mxu0 0.0
        %759 = vmatprep.subr.mxu0 0.0
        %760 = vmatpush1.msra.mxu0 0.0
        %761 = vmatprep.subr.mxu0 0.0
        %762 = vmatpush1.msra.mxu0 0.0
        %763 = vmatprep.subr.mxu0 0.0
        %764 = vmatpush1.msra.mxu0 0.0
        %765 = vmatprep.subr.mxu0 0.0
        %766 = vmatpush1.msra.mxu0 0.0
        %767 = vmatprep.subr.mxu0 0.0
        %768 = vmatpush1.msra.mxu0 0.0
        %769 = vmatprep.subr.mxu0 0.0
        %770 = vmatpush1.msra.mxu0 0.0
        %771 = vmatprep.subr.mxu0 0.0
        %772 = vmatpush1.msra.mxu0 0.0
        %773 = vmatprep.subr.mxu0 0.0
        %774 = vmatpush1.msra.mxu0 0.0
        %775 = vmatprep.subr.mxu0 0.0
        %776 = vmatpush1.msra.mxu0 0.0
        %777 = vmatprep.subr.mxu0 0.0
        %778 = vmatpush1.msra.mxu0 0.0
        %779 = vmatprep.subr.mxu0 0.0
        %780 = vmatpush1.msra.mxu0 0.0
        %781 = vmatprep.subr.mxu0 0.0
        %782 = vmatpush1.msra.mxu0 0.0
        %783 = vmatprep.subr.mxu0 0.0
        %784 = vmatpush1.msra.mxu0 0.0
        %785 = vmatprep.subr.mxu0 0.0
        %786 = vmatpush1.msra.mxu0 0.0
        %787 = vmatprep.subr.mxu0 0.0
        %788 = vmatpush1.msra.mxu0 0.0
        %789 = vmatprep.subr.mxu0 0.0
        %790 = vmatpush1.msra.mxu0 0.0
        %791 = vmatprep.subr.mxu0 0.0
        %792 = vmatpush1.msra.mxu0 0.0
        %793 = vmatprep.subr.mxu0 0.0
        %794 = vmatpush1.msra.mxu0 0.0
        %795 = vmatprep.subr.mxu0 0.0
        %796 = vmatpush1.msra.mxu0 0.0
        %797 = vmatprep.subr.mxu0 0.0
        %798 = vmatpush1.msra.mxu0 0.0
        %799 = vmatprep.subr.mxu0 0.0
        %800 = vmatpush1.msra.mxu0 0.0
        %801 = vmatprep.subr.mxu0 0.0
        %802 = vmatpush1.msra.mxu0 0.0
        %803 = vmatprep.subr.mxu0 0.0
        %804 = vmatpush1.msra.mxu0 0.0
        %805 = vmatprep.subr.mxu0 0.0
        %806 = vmatpush1.msra.mxu0 0.0
        %807 = vmatprep.mubr.f32.mxu0 0.0
        %808 = vmatmul.mubr.f32.gmra.mrb[0].mxu0 %v732
        %v809 = vpop.f32.mrb[0].mxu0
        %v810 = vadd.f32 0.0, %v809
        %v811 = vpop.f32.mrb[0].mxu0
        %812 = vmatprep.mubr.f32.mxu0 0.0
        %813 = vmatmul.mubr.f32.gmra.mrb[0].mxu0 %v735
        %v814 = vpop.f32.mrb[0].mxu0
        %v815 = vadd.f32 0.0, %v814
        %v816 = vpop.f32.mrb[0].mxu0
        %817 = vmatprep.mubr.f32.mxu0 0.0
        %818 = vmatmul.mubr.f32.gmra.mrb[0].mxu0 %v738
        %v819 = vpop.f32.mrb[0].mxu0
        %v820 = vadd.f32 0.0, %v819
        %v821 = vpop.f32.mrb[0].mxu0
        %822 = vmatprep.mubr.f32.mxu0 0.0
        %823 = vmatmul.mubr.f32.gmra.mrb[0].mxu0 %v741
        %v824 = vpop.f32.mrb[0].mxu0
        %v825 = vadd.f32 0.0, %v824
        %v826 = vpop.f32.mrb[0].mxu0
        %827 = vdwg.mxu0
        %vm828 = vcmp.ge.f32.partialorder %v810, 2.0
        %vm829 = vcmp.ge.f32.partialorder %v815, 2.0
        %vm830 = vcmp.ge.f32.partialorder %v820, 2.0
        %vm831 = vcmp.ge.f32.partialorder %v825, 2.0
        %v832 = vsel %vm828, %v709, -inf
        %v833 = vsel %vm829, %v712, -inf
        %v834 = vsel %vm830, %v715, -inf
        %v835 = vsel %vm831, %v718, -inf
        %vm836 = vcmp.lt.f32.partialorder %v702, %v709
        %vm837 = vcmp.lt.f32.partialorder %v703, %v712
        %vm838 = vcmp.lt.f32.partialorder %v704, %v715
        %vm839 = vcmp.lt.f32.partialorder %v705, %v718
        %v840 = vsel %vm836, %v702, -inf
        %v841 = vsel %vm837, %v703, -inf
        %v842 = vsel %vm838, %v704, -inf
        %v843 = vsel %vm839, %v705, -inf
        %v844 = vsel %vm706, %v840, -inf
        %845 = vmax.xlane.f32.xlu0 %v844
        %v846 = vpop.xlane.xlu0 %845
        %v847 = vsel %vm706, %v841, -inf
        %848 = vmax.xlane.f32.xlu0 %v847
        %v849 = vpop.xlane.xlu0 %848
        %v850 = vsel %vm706, %v842, -inf
        %851 = vmax.xlane.f32.xlu0 %v850
        %v852 = vpop.xlane.xlu0 %851
        %v853 = vsel %vm706, %v843, -inf
        %854 = vmax.xlane.f32.xlu0 %v853
        %v855 = vpop.xlane.xlu0 %854
        %vm856 = vcmp.ge.f32.partialorder %v702, %v846
        %vm857 = vcmp.ge.f32.partialorder %v703, %v849
        %vm858 = vcmp.ge.f32.partialorder %v704, %v852
        %vm859 = vcmp.ge.f32.partialorder %v705, %v855
        %v860 = vsel %vm856, 1, 0
        %v861 = vsel %vm857, 1, 0
        %v862 = vsel %vm858, 1, 0
        %v863 = vsel %vm859, 1, 0
        %v864 = vcvt.s32.f32 %v860
        %v865 = vcvt.s32.f32 %v861
        %v866 = vcvt.s32.f32 %v862
        %v867 = vcvt.s32.f32 %v863
        %v869 = vsel %vm706, %v864, 0
        %v872 = vsel %vm706, %v865, 0
        %v875 = vsel %vm706, %v866, 0
        %v878 = vsel %vm706, %v867, 0
        %880 = vmatprep.subr.mxu0 0.0
        %881 = vmatpush1.msra.mxu0 1.0
        %882 = vmatprep.subr.mxu0 0.0
        %883 = vmatpush1.msra.mxu0 0.0
        %884 = vmatprep.subr.mxu0 0.0
        %885 = vmatpush1.msra.mxu0 0.0
        %886 = vmatprep.subr.mxu0 0.0
        %887 = vmatpush1.msra.mxu0 0.0
        %888 = vmatprep.subr.mxu0 0.0
        %889 = vmatpush1.msra.mxu0 0.0
        %890 = vmatprep.subr.mxu0 0.0
        %891 = vmatpush1.msra.mxu0 0.0
        %892 = vmatprep.subr.mxu0 0.0
        %893 = vmatpush1.msra.mxu0 0.0
        %894 = vmatprep.subr.mxu0 0.0
        %895 = vmatpush1.msra.mxu0 0.0
        %896 = vmatprep.subr.mxu0 0.0
        %897 = vmatpush1.msra.mxu0 0.0
        %898 = vmatprep.subr.mxu0 0.0
        %899 = vmatpush1.msra.mxu0 0.0
        %900 = vmatprep.subr.mxu0 0.0
        %901 = vmatpush1.msra.mxu0 0.0
        %902 = vmatprep.subr.mxu0 0.0
        %903 = vmatpush1.msra.mxu0 0.0
        %904 = vmatprep.subr.mxu0 0.0
        %905 = vmatpush1.msra.mxu0 0.0
        %906 = vmatprep.subr.mxu0 0.0
        %907 = vmatpush1.msra.mxu0 0.0
        %908 = vmatprep.subr.mxu0 0.0
        %909 = vmatpush1.msra.mxu0 0.0
        %910 = vmatprep.subr.mxu0 0.0
        %911 = vmatpush1.msra.mxu0 0.0
        %912 = vmatprep.subr.mxu0 0.0
        %913 = vmatpush1.msra.mxu0 0.0
        %914 = vmatprep.subr.mxu0 0.0
        %915 = vmatpush1.msra.mxu0 0.0
        %916 = vmatprep.subr.mxu0 0.0
        %917 = vmatpush1.msra.mxu0 0.0
        %918 = vmatprep.subr.mxu0 0.0
        %919 = vmatpush1.msra.mxu0 0.0
        %920 = vmatprep.subr.mxu0 0.0
        %921 = vmatpush1.msra.mxu0 0.0
        %922 = vmatprep.subr.mxu0 0.0
        %923 = vmatpush1.msra.mxu0 0.0
        %924 = vmatprep.subr.mxu0 0.0
        %925 = vmatpush1.msra.mxu0 0.0
        %926 = vmatprep.subr.mxu0 0.0
        %927 = vmatpush1.msra.mxu0 0.0
        %928 = vmatprep.subr.mxu0 0.0
        %929 = vmatpush1.msra.mxu0 0.0
        %930 = vmatprep.subr.mxu0 0.0
        %931 = vmatpush1.msra.mxu0 0.0
        %932 = vmatprep.subr.mxu0 0.0
        %933 = vmatpush1.msra.mxu0 0.0
        %934 = vmatprep.subr.mxu0 0.0
        %935 = vmatpush1.msra.mxu0 0.0
        %936 = vmatprep.subr.mxu0 0.0
        %937 = vmatpush1.msra.mxu0 0.0
        %938 = vmatprep.subr.mxu0 0.0
        %939 = vmatpush1.msra.mxu0 0.0
        %940 = vmatprep.subr.mxu0 0.0
        %941 = vmatpush1.msra.mxu0 0.0
        %942 = vmatprep.subr.mxu0 0.0
        %943 = vmatpush1.msra.mxu0 0.0
        %944 = vmatprep.mubr.f32.mxu0 0.0
        %945 = vmatmul.mubr.f32.gmra.mrb[0].mxu0 %v869
        %v946 = vpop.f32.mrb[0].mxu0
        %v947 = vadd.f32 0.0, %v946
        %v948 = vpop.f32.mrb[0].mxu0
        %949 = vmatprep.mubr.f32.mxu0 0.0
        %950 = vmatmul.mubr.f32.gmra.mrb[0].mxu0 %v872
        %v951 = vpop.f32.mrb[0].mxu0
        %v952 = vadd.f32 0.0, %v951
        %v953 = vpop.f32.mrb[0].mxu0
        %954 = vmatprep.mubr.f32.mxu0 0.0
        %955 = vmatmul.mubr.f32.gmra.mrb[0].mxu0 %v875
        %v956 = vpop.f32.mrb[0].mxu0
        %v957 = vadd.f32 0.0, %v956
        %v958 = vpop.f32.mrb[0].mxu0
        %959 = vmatprep.mubr.f32.mxu0 0.0
        %960 = vmatmul.mubr.f32.gmra.mrb[0].mxu0 %v878
        %v961 = vpop.f32.mrb[0].mxu0
        %v962 = vadd.f32 0.0, %v961
        %v963 = vpop.f32.mrb[0].mxu0
        %964 = vdwg.mxu0
        %vm965 = vcmp.ge.f32.partialorder %v947, 2.0
        %vm966 = vcmp.ge.f32.partialorder %v952, 2.0
        %vm967 = vcmp.ge.f32.partialorder %v957, 2.0
        %vm968 = vcmp.ge.f32.partialorder %v962, 2.0
        %v969 = vsel %vm965, %v846, -inf
        %v970 = vsel %vm966, %v849, -inf
        %v971 = vsel %vm967, %v852, -inf
        %v972 = vsel %vm968, %v855, -inf
        %v973 = vmax.f32 %v832, %v969
        %v974 = vmax.f32 %v833, %v970
        %v975 = vmax.f32 %v834, %v971
        %v976 = vmax.f32 %v835, %v972
        %978 = vset.pattern.permute.xlu0 0
        %979 = vperm.xlu0 %978, %v973
        %v980 = vpop.permute.xlu0 %979
        %983 = vset.pattern.permute.xlu0 0
        %984 = vperm.xlu0 %983, %v974
        %v985 = vpop.permute.xlu0 %984
        %988 = vset.pattern.permute.xlu0 0
        %989 = vperm.xlu0 %988, %v975
        %v990 = vpop.permute.xlu0 %989
        %993 = vset.pattern.permute.xlu0 0
        %994 = vperm.xlu0 %993, %v976
        %v995 = vpop.permute.xlu0 %994
        %vm997 = vcmp.lt.f32.partialorder %v702, %v980
        %vm998 = vcmp.lt.f32.partialorder %v703, %v985
        %vm999 = vcmp.lt.f32.partialorder %v704, %v990
        %vm1000 = vcmp.lt.f32.partialorder %v705, %v995
        %v1001 = vsel %vm997, -1e-07, %v702
        %v1002 = vsel %vm998, -1e-07, %v703
        %v1003 = vsel %vm999, -1e-07, %v704
        %v1004 = vsel %vm1000, -1e-07, %v705
        %v1005 = vmax.f32 %v709, -1e-07
        %v1006 = vmax.f32 %v712, -1e-07
        %v1007 = vmax.f32 %v715, -1e-07
        %v1008 = vmax.f32 %v718, -1e-07
        %v1009 = vsub.f32 %v1001, %v1005
        %v1010 = vsub.f32 %v1002, %v1006
        %v1011 = vsub.f32 %v1003, %v1007
        %v1012 = vsub.f32 %v1004, %v1008
        %v1013 = vmul.f32 %v1009, 3.3333333
        %v1014 = vmul.f32 %v1010, 3.3333333
        %v1015 = vmul.f32 %v1011, 3.3333333
        %v1016 = vmul.f32 %v1012, 3.3333333
        %v1017 = vmul.f32 %v1013, 1.442695
        %v1018 = vpow.pop %v1017
        %v1019 = vmul.f32 %v1014, 1.442695
        %v1020 = vpow.pop %v1019
        %v1021 = vmul.f32 %v1015, 1.442695
        %v1022 = vpow.pop %v1021
        %v1023 = vmul.f32 %v1016, 1.442695
        %v1024 = vpow.pop %v1023
        %v1026 = vsel %vm706, %v1018, 0
        %v1029 = vsel %vm706, %v1020, 0
        %v1032 = vsel %vm706, %v1022, 0
        %v1035 = vsel %vm706, %v1024, 0
        %1037 = vmatprep.subr.mxu0 0.0
        %1038 = vmatpush1.msra.mxu0 1.0
        %1039 = vmatprep.subr.mxu0 0.0
        %1040 = vmatpush1.msra.mxu0 0.0
        %1041 = vmatprep.subr.mxu0 0.0
        %1042 = vmatpush1.msra.mxu0 0.0
        %1043 = vmatprep.subr.mxu0 0.0
        %1044 = vmatpush1.msra.mxu0 0.0
        %1045 = vmatprep.subr.mxu0 0.0
        %1046 = vmatpush1.msra.mxu0 0.0
        %1047 = vmatprep.subr.mxu0 0.0
        %1048 = vmatpush1.msra.mxu0 0.0
        %1049 = vmatprep.subr.mxu0 0.0
        %1050 = vmatpush1.msra.mxu0 0.0
        %1051 = vmatprep.subr.mxu0 0.0
        %1052 = vmatpush1.msra.mxu0 0.0
        %1053 = vmatprep.subr.mxu0 0.0
        %1054 = vmatpush1.msra.mxu0 0.0
        %1055 = vmatprep.subr.mxu0 0.0
        %1056 = vmatpush1.msra.mxu0 0.0
        %1057 = vmatprep.subr.mxu0 0.0
        %1058 = vmatpush1.msra.mxu0 0.0
        %1059 = vmatprep.subr.mxu0 0.0
        %1060 = vmatpush1.msra.mxu0 0.0
        %1061 = vmatprep.subr.mxu0 0.0
        %1062 = vmatpush1.msra.mxu0 0.0
        %1063 = vmatprep.subr.mxu0 0.0
        %1064 = vmatpush1.msra.mxu0 0.0
        %1065 = vmatprep.subr.mxu0 0.0
        %1066 = vmatpush1.msra.mxu0 0.0
        %1067 = vmatprep.subr.mxu0 0.0
        %1068 = vmatpush1.msra.mxu0 0.0
        %1069 = vmatprep.subr.mxu0 0.0
        %1070 = vmatpush1.msra.mxu0 0.0
        %1071 = vmatprep.subr.mxu0 0.0
        %1072 = vmatpush1.msra.mxu0 0.0
        %1073 = vmatprep.subr.mxu0 0.0
        %1074 = vmatpush1.msra.mxu0 0.0
        %1075 = vmatprep.subr.mxu0 0.0
        %1076 = vmatpush1.msra.mxu0 0.0
        %1077 = vmatprep.subr.mxu0 0.0
        %1078 = vmatpush1.msra.mxu0 0.0
        %1079 = vmatprep.subr.mxu0 0.0
        %1080 = vmatpush1.msra.mxu0 0.0
        %1081 = vmatprep.subr.mxu0 0.0
        %1082 = vmatpush1.msra.mxu0 0.0
        %1083 = vmatprep.subr.mxu0 0.0
        %1084 = vmatpush1.msra.mxu0 0.0
        %1085 = vmatprep.subr.mxu0 0.0
        %1086 = vmatpush1.msra.mxu0 0.0
        %1087 = vmatprep.subr.mxu0 0.0
        %1088 = vmatpush1.msra.mxu0 0.0
        %1089 = vmatprep.subr.mxu0 0.0
        %1090 = vmatpush1.msra.mxu0 0.0
        %1091 = vmatprep.subr.mxu0 0.0
        %1092 = vmatpush1.msra.mxu0 0.0
        %1093 = vmatprep.subr.mxu0 0.0
        %1094 = vmatpush1.msra.mxu0 0.0
        %1095 = vmatprep.subr.mxu0 0.0
        %1096 = vmatpush1.msra.mxu0 0.0
        %1097 = vmatprep.subr.mxu0 0.0
        %1098 = vmatpush1.msra.mxu0 0.0
        %1099 = vmatprep.subr.mxu0 0.0
        %1100 = vmatpush1.msra.mxu0 0.0
        %1101 = vmatprep.mubr.f32.mxu0 0.0
        %1102 = vmatmul.mubr.f32.gmra.mrb[0].mxu0 %v1026
        %v1103 = vpop.f32.mrb[0].mxu0
        %v1104 = vadd.f32 0.0, %v1103
        %v1105 = vpop.f32.mrb[0].mxu0
        %1106 = vmatprep.mubr.f32.mxu0 0.0
        %1107 = vmatmul.mubr.f32.gmra.mrb[0].mxu0 %v1029
        %v1108 = vpop.f32.mrb[0].mxu0
        %v1109 = vadd.f32 0.0, %v1108
        %v1110 = vpop.f32.mrb[0].mxu0
        %1111 = vmatprep.mubr.f32.mxu0 0.0
        %1112 = vmatmul.mubr.f32.gmra.mrb[0].mxu0 %v1032
        %v1113 = vpop.f32.mrb[0].mxu0
        %v1114 = vadd.f32 0.0, %v1113
        %v1115 = vpop.f32.mrb[0].mxu0
        %1116 = vmatprep.mubr.f32.mxu0 0.0
        %1117 = vmatmul.mubr.f32.gmra.mrb[0].mxu0 %v1035
        %v1118 = vpop.f32.mrb[0].mxu0
        %v1119 = vadd.f32 0.0, %v1118
        %v1120 = vpop.f32.mrb[0].mxu0
        %1121 = vdwg.mxu0
        %v1122 = vrcp.pop %v1104
        %v1123 = vrcp.pop %v1109
        %v1124 = vrcp.pop %v1114
        %v1125 = vrcp.pop %v1119
        %1127 = vset.pattern.permute.xlu0 0
        %1128 = vperm.xlu0 %1127, %v1122
        %v1129 = vpop.permute.xlu0 %1128
        %1132 = vset.pattern.permute.xlu0 0
        %1133 = vperm.xlu0 %1132, %v1123
        %v1134 = vpop.permute.xlu0 %1133
        %1137 = vset.pattern.permute.xlu0 0
        %1138 = vperm.xlu0 %1137, %v1124
        %v1139 = vpop.permute.xlu0 %1138
        %1142 = vset.pattern.permute.xlu0 0
        %1143 = vperm.xlu0 %1142, %v1125
        %v1144 = vpop.permute.xlu0 %1143
        %v1146 = vmul.f32 %v1018, %v1129
        %v1147 = vmul.f32 %v1020, %v1134
        %v1148 = vmul.f32 %v1022, %v1139
        %v1149 = vmul.f32 %v1024, %v1144
        %v1151 = vsel %vm706, %v1146, 0
        %1153 = vmatprep.subr.mxu0 0.0
        %1154 = vmatpush1.msra.mxu0 %v272
        %1155 = vmatprep.subr.mxu0 0.0
        %1156 = vmatpush1.msra.mxu0 0.0
        %1157 = vmatprep.subr.mxu0 0.0
        %1158 = vmatpush1.msra.mxu0 0.0
        %1159 = vmatprep.subr.mxu0 0.0
        %1160 = vmatpush1.msra.mxu0 0.0
        %1161 = vmatprep.subr.mxu0 0.0
        %1162 = vmatpush1.msra.mxu0 0.0
        %1163 = vmatprep.subr.mxu0 0.0
        %1164 = vmatpush1.msra.mxu0 0.0
        %1165 = vmatprep.subr.mxu0 0.0
        %1166 = vmatpush1.msra.mxu0 0.0
        %1167 = vmatprep.subr.mxu0 0.0
        %1168 = vmatpush1.msra.mxu0 0.0
        %1169 = vmatprep.subr.mxu0 0.0
        %1170 = vmatpush1.msra.mxu0 0.0
        %1171 = vmatprep.subr.mxu0 0.0
        %1172 = vmatpush1.msra.mxu0 0.0
        %1173 = vmatprep.subr.mxu0 0.0
        %1174 = vmatpush1.msra.mxu0 0.0
        %1175 = vmatprep.subr.mxu0 0.0
        %1176 = vmatpush1.msra.mxu0 0.0
        %1177 = vmatprep.subr.mxu0 0.0
        %1178 = vmatpush1.msra.mxu0 0.0
        %1179 = vmatprep.subr.mxu0 0.0
        %1180 = vmatpush1.msra.mxu0 0.0
        %1181 = vmatprep.subr.mxu0 0.0
        %1182 = vmatpush1.msra.mxu0 0.0
        %1183 = vmatprep.subr.mxu0 0.0
        %1184 = vmatpush1.msra.mxu0 0.0
        %1185 = vmatprep.subr.mxu0 0.0
        %1186 = vmatpush1.msra.mxu0 0.0
        %1187 = vmatprep.subr.mxu0 0.0
        %1188 = vmatpush1.msra.mxu0 0.0
        %1189 = vmatprep.subr.mxu0 0.0
        %1190 = vmatpush1.msra.mxu0 0.0
        %1191 = vmatprep.subr.mxu0 0.0
        %1192 = vmatpush1.msra.mxu0 0.0
        %1193 = vmatprep.subr.mxu0 0.0
        %1194 = vmatpush1.msra.mxu0 0.0
        %1195 = vmatprep.subr.mxu0 0.0
        %1196 = vmatpush1.msra.mxu0 0.0
        %1197 = vmatprep.subr.mxu0 0.0
        %1198 = vmatpush1.msra.mxu0 0.0
        %1199 = vmatprep.subr.mxu0 0.0
        %1200 = vmatpush1.msra.mxu0 0.0
        %1201 = vmatprep.subr.mxu0 0.0
        %1202 = vmatpush1.msra.mxu0 0.0
        %1203 = vmatprep.subr.mxu0 0.0
        %1204 = vmatpush1.msra.mxu0 0.0
        %1205 = vmatprep.subr.mxu0 0.0
        %1206 = vmatpush1.msra.mxu0 0.0
        %1207 = vmatprep.subr.mxu0 0.0
        %1208 = vmatpush1.msra.mxu0 0.0
        %1209 = vmatprep.subr.mxu0 0.0
        %1210 = vmatpush1.msra.mxu0 0.0
        %1211 = vmatprep.subr.mxu0 0.0
        %1212 = vmatpush1.msra.mxu0 0.0
        %1213 = vmatprep.subr.mxu0 0.0
        %1214 = vmatpush1.msra.mxu0 0.0
        %1215 = vmatprep.subr.mxu0 0.0
        %1216 = vmatpush1.msra.mxu0 0.0
        %1217 = vmatprep.mubr.f32.mxu0 0.0
        %1218 = vmatmul.mubr.f32.gmra.mrb[0].mxu0 %v1151
        %v1219 = vpop.f32.mrb[0].mxu0
        %v1220 = vadd.f32 0.0, %v1219
        %v1221 = vpop.f32.mrb[0].mxu0
        %1222 = vdwg.mxu0
        %v1224 = vsel %vm706, %v1147, 0
        %1226 = vmatprep.subr.mxu0 0.0
        %1227 = vmatpush1.msra.mxu0 %v273
        %1228 = vmatprep.subr.mxu0 0.0
        %1229 = vmatpush1.msra.mxu0 0.0
        %1230 = vmatprep.subr.mxu0 0.0
        %1231 = vmatpush1.msra.mxu0 0.0
        %1232 = vmatprep.subr.mxu0 0.0
        %1233 = vmatpush1.msra.mxu0 0.0
        %1234 = vmatprep.subr.mxu0 0.0
        %1235 = vmatpush1.msra.mxu0 0.0
        %1236 = vmatprep.subr.mxu0 0.0
        %1237 = vmatpush1.msra.mxu0 0.0
        %1238 = vmatprep.subr.mxu0 0.0
        %1239 = vmatpush1.msra.mxu0 0.0
        %1240 = vmatprep.subr.mxu0 0.0
        %1241 = vmatpush1.msra.mxu0 0.0
        %1242 = vmatprep.subr.mxu0 0.0
        %1243 = vmatpush1.msra.mxu0 0.0
        %1244 = vmatprep.subr.mxu0 0.0
        %1245 = vmatpush1.msra.mxu0 0.0
        %1246 = vmatprep.subr.mxu0 0.0
        %1247 = vmatpush1.msra.mxu0 0.0
        %1248 = vmatprep.subr.mxu0 0.0
        %1249 = vmatpush1.msra.mxu0 0.0
        %1250 = vmatprep.subr.mxu0 0.0
        %1251 = vmatpush1.msra.mxu0 0.0
        %1252 = vmatprep.subr.mxu0 0.0
        %1253 = vmatpush1.msra.mxu0 0.0
        %1254 = vmatprep.subr.mxu0 0.0
        %1255 = vmatpush1.msra.mxu0 0.0
        %1256 = vmatprep.subr.mxu0 0.0
        %1257 = vmatpush1.msra.mxu0 0.0
        %1258 = vmatprep.subr.mxu0 0.0
        %1259 = vmatpush1.msra.mxu0 0.0
        %1260 = vmatprep.subr.mxu0 0.0
        %1261 = vmatpush1.msra.mxu0 0.0
        %1262 = vmatprep.subr.mxu0 0.0
        %1263 = vmatpush1.msra.mxu0 0.0
        %1264 = vmatprep.subr.mxu0 0.0
        %1265 = vmatpush1.msra.mxu0 0.0
        %1266 = vmatprep.subr.mxu0 0.0
        %1267 = vmatpush1.msra.mxu0 0.0
        %1268 = vmatprep.subr.mxu0 0.0
        %1269 = vmatpush1.msra.mxu0 0.0
        %1270 = vmatprep.subr.mxu0 0.0
        %1271 = vmatpush1.msra.mxu0 0.0
        %1272 = vmatprep.subr.mxu0 0.0
        %1273 = vmatpush1.msra.mxu0 0.0
        %1274 = vmatprep.subr.mxu0 0.0
        %1275 = vmatpush1.msra.mxu0 0.0
        %1276 = vmatprep.subr.mxu0 0.0
        %1277 = vmatpush1.msra.mxu0 0.0
        %1278 = vmatprep.subr.mxu0 0.0
        %1279 = vmatpush1.msra.mxu0 0.0
        %1280 = vmatprep.subr.mxu0 0.0
        %1281 = vmatpush1.msra.mxu0 0.0
        %1282 = vmatprep.subr.mxu0 0.0
        %1283 = vmatpush1.msra.mxu0 0.0
        %1284 = vmatprep.subr.mxu0 0.0
        %1285 = vmatpush1.msra.mxu0 0.0
        %1286 = vmatprep.subr.mxu0 0.0
        %1287 = vmatpush1.msra.mxu0 0.0
        %1288 = vmatprep.subr.mxu0 0.0
        %1289 = vmatpush1.msra.mxu0 0.0
        %1290 = vmatprep.mubr.f32.mxu0 0.0
        %1291 = vmatmul.mubr.f32.gmra.mrb[0].mxu0 %v1224
        %v1292 = vpop.f32.mrb[0].mxu0
        %v1293 = vadd.f32 0.0, %v1292
        %v1294 = vpop.f32.mrb[0].mxu0
        %1295 = vdwg.mxu0
        %v1297 = vsel %vm706, %v1148, 0
        %1299 = vmatprep.subr.mxu0 0.0
        %1300 = vmatpush1.msra.mxu0 %v274
        %1301 = vmatprep.subr.mxu0 0.0
        %1302 = vmatpush1.msra.mxu0 0.0
        %1303 = vmatprep.subr.mxu0 0.0
        %1304 = vmatpush1.msra.mxu0 0.0
        %1305 = vmatprep.subr.mxu0 0.0
        %1306 = vmatpush1.msra.mxu0 0.0
        %1307 = vmatprep.subr.mxu0 0.0
        %1308 = vmatpush1.msra.mxu0 0.0
        %1309 = vmatprep.subr.mxu0 0.0
        %1310 = vmatpush1.msra.mxu0 0.0
        %1311 = vmatprep.subr.mxu0 0.0
        %1312 = vmatpush1.msra.mxu0 0.0
        %1313 = vmatprep.subr.mxu0 0.0
        %1314 = vmatpush1.msra.mxu0 0.0
        %1315 = vmatprep.subr.mxu0 0.0
        %1316 = vmatpush1.msra.mxu0 0.0
        %1317 = vmatprep.subr.mxu0 0.0
        %1318 = vmatpush1.msra.mxu0 0.0
        %1319 = vmatprep.subr.mxu0 0.0
        %1320 = vmatpush1.msra.mxu0 0.0
        %1321 = vmatprep.subr.mxu0 0.0
        %1322 = vmatpush1.msra.mxu0 0.0
        %1323 = vmatprep.subr.mxu0 0.0
        %1324 = vmatpush1.msra.mxu0 0.0
        %1325 = vmatprep.subr.mxu0 0.0
        %1326 = vmatpush1.msra.mxu0 0.0
        %1327 = vmatprep.subr.mxu0 0.0
        %1328 = vmatpush1.msra.mxu0 0.0
        %1329 = vmatprep.subr.mxu0 0.0
        %1330 = vmatpush1.msra.mxu0 0.0
        %1331 = vmatprep.subr.mxu0 0.0
        %1332 = vmatpush1.msra.mxu0 0.0
        %1333 = vmatprep.subr.mxu0 0.0
        %1334 = vmatpush1.msra.mxu0 0.0
        %1335 = vmatprep.subr.mxu0 0.0
        %1336 = vmatpush1.msra.mxu0 0.0
        %1337 = vmatprep.subr.mxu0 0.0
        %1338 = vmatpush1.msra.mxu0 0.0
        %1339 = vmatprep.subr.mxu0 0.0
        %1340 = vmatpush1.msra.mxu0 0.0
        %1341 = vmatprep.subr.mxu0 0.0
        %1342 = vmatpush1.msra.mxu0 0.0
        %1343 = vmatprep.subr.mxu0 0.0
        %1344 = vmatpush1.msra.mxu0 0.0
        %1345 = vmatprep.subr.mxu0 0.0
        %1346 = vmatpush1.msra.mxu0 0.0
        %1347 = vmatprep.subr.mxu0 0.0
        %1348 = vmatpush1.msra.mxu0 0.0
        %1349 = vmatprep.subr.mxu0 0.0
        %1350 = vmatpush1.msra.mxu0 0.0
        %1351 = vmatprep.subr.mxu0 0.0
        %1352 = vmatpush1.msra.mxu0 0.0
        %1353 = vmatprep.subr.mxu0 0.0
        %1354 = vmatpush1.msra.mxu0 0.0
        %1355 = vmatprep.subr.mxu0 0.0
        %1356 = vmatpush1.msra.mxu0 0.0
        %1357 = vmatprep.subr.mxu0 0.0
        %1358 = vmatpush1.msra.mxu0 0.0
        %1359 = vmatprep.subr.mxu0 0.0
        %1360 = vmatpush1.msra.mxu0 0.0
        %1361 = vmatprep.subr.mxu0 0.0
        %1362 = vmatpush1.msra.mxu0 0.0
        %1363 = vmatprep.mubr.f32.mxu0 0.0
        %1364 = vmatmul.mubr.f32.gmra.mrb[0].mxu0 %v1297
        %v1365 = vpop.f32.mrb[0].mxu0
        %v1366 = vadd.f32 0.0, %v1365
        %v1367 = vpop.f32.mrb[0].mxu0
        %1368 = vdwg.mxu0
        %v1370 = vsel %vm706, %v1149, 0
        %1372 = vmatprep.subr.mxu0 0.0
        %1373 = vmatpush1.msra.mxu0 %v275
        %1374 = vmatprep.subr.mxu0 0.0
        %1375 = vmatpush1.msra.mxu0 0.0
        %1376 = vmatprep.subr.mxu0 0.0
        %1377 = vmatpush1.msra.mxu0 0.0
        %1378 = vmatprep.subr.mxu0 0.0
        %1379 = vmatpush1.msra.mxu0 0.0
        %1380 = vmatprep.subr.mxu0 0.0
        %1381 = vmatpush1.msra.mxu0 0.0
        %1382 = vmatprep.subr.mxu0 0.0
        %1383 = vmatpush1.msra.mxu0 0.0
        %1384 = vmatprep.subr.mxu0 0.0
        %1385 = vmatpush1.msra.mxu0 0.0
        %1386 = vmatprep.subr.mxu0 0.0
        %1387 = vmatpush1.msra.mxu0 0.0
        %1388 = vmatprep.subr.mxu0 0.0
        %1389 = vmatpush1.msra.mxu0 0.0
        %1390 = vmatprep.subr.mxu0 0.0
        %1391 = vmatpush1.msra.mxu0 0.0
        %1392 = vmatprep.subr.mxu0 0.0
        %1393 = vmatpush1.msra.mxu0 0.0
        %1394 = vmatprep.subr.mxu0 0.0
        %1395 = vmatpush1.msra.mxu0 0.0
        %1396 = vmatprep.subr.mxu0 0.0
        %1397 = vmatpush1.msra.mxu0 0.0
        %1398 = vmatprep.subr.mxu0 0.0
        %1399 = vmatpush1.msra.mxu0 0.0
        %1400 = vmatprep.subr.mxu0 0.0
        %1401 = vmatpush1.msra.mxu0 0.0
        %1402 = vmatprep.subr.mxu0 0.0
        %1403 = vmatpush1.msra.mxu0 0.0
        %1404 = vmatprep.subr.mxu0 0.0
        %1405 = vmatpush1.msra.mxu0 0.0
        %1406 = vmatprep.subr.mxu0 0.0
        %1407 = vmatpush1.msra.mxu0 0.0
        %1408 = vmatprep.subr.mxu0 0.0
        %1409 = vmatpush1.msra.mxu0 0.0
        %1410 = vmatprep.subr.mxu0 0.0
        %1411 = vmatpush1.msra.mxu0 0.0
        %1412 = vmatprep.subr.mxu0 0.0
        %1413 = vmatpush1.msra.mxu0 0.0
        %1414 = vmatprep.subr.mxu0 0.0
        %1415 = vmatpush1.msra.mxu0 0.0
        %1416 = vmatprep.subr.mxu0 0.0
        %1417 = vmatpush1.msra.mxu0 0.0
        %1418 = vmatprep.subr.mxu0 0.0
        %1419 = vmatpush1.msra.mxu0 0.0
        %1420 = vmatprep.subr.mxu0 0.0
        %1421 = vmatpush1.msra.mxu0 0.0
        %1422 = vmatprep.subr.mxu0 0.0
        %1423 = vmatpush1.msra.mxu0 0.0
        %1424 = vmatprep.subr.mxu0 0.0
        %1425 = vmatpush1.msra.mxu0 0.0
        %1426 = vmatprep.subr.mxu0 0.0
        %1427 = vmatpush1.msra.mxu0 0.0
        %1428 = vmatprep.subr.mxu0 0.0
        %1429 = vmatpush1.msra.mxu0 0.0
        %1430 = vmatprep.subr.mxu0 0.0
        %1431 = vmatpush1.msra.mxu0 0.0
        %1432 = vmatprep.subr.mxu0 0.0
        %1433 = vmatpush1.msra.mxu0 0.0
        %1434 = vmatprep.subr.mxu0 0.0
        %1435 = vmatpush1.msra.mxu0 0.0
        %1436 = vmatprep.mubr.f32.mxu0 0.0
        %1437 = vmatmul.mubr.f32.gmra.mrb[0].mxu0 %v1370
        %v1438 = vpop.f32.mrb[0].mxu0
        %v1439 = vadd.f32 0.0, %v1438
        %v1440 = vpop.f32.mrb[0].mxu0
        %1441 = vdwg.mxu0
        %v1442 = vld [vmem:[%s4] sm:$0xff]
        %v1443 = vld [vmem:[%s4 + $0x8] sm:$0xff]
        %v1444 = vld [vmem:[%s4 + $0x10] sm:$0xff]
        %v1445 = vld [vmem:[%s4 + $0x18] sm:$0x3f]
        %v1446 = vld [vmem:[%s5] sm:$0x1]
        %v1448 = vlaneseq
        %v1449 = vshrl.u32 %v1448, 7
        %v1450 = vsub.s32 0, %v1449
        %v1451 = vrot.slane %v1446, %v1450
        %v1454 = vsel %vm292, %v1220, 0
        %v1457 = vsel %vm292, %v1293, 0
        %v1460 = vsel %vm292, %v1366, 0
        %v1463 = vsel %vm292, %v1439, 0
        %v1466 = vsel %vm305, %v1445, 0
        %1468 = vmatprep.subr.mxu0 0.0
        %1469 = vmatpush1.msra.mxu0 %v1442
        %1470 = vmatprep.subr.mxu0 0.0
        %1471 = vmatpush1.msra.mxu0 %v1443
        %1472 = vmatprep.subr.mxu0 0.0
        %1473 = vmatpush1.msra.mxu0 %v1444
        %1474 = vmatprep.subr.mxu0 0.0
        %1475 = vmatpush1.msra.mxu0 %v1466
        %1476 = vmatprep.subr.mxu0 0.0
        %1477 = vmatpush1.msra.mxu0 0.0
        %1478 = vmatprep.subr.mxu0 0.0
        %1479 = vmatpush1.msra.mxu0 0.0
        %1480 = vmatprep.subr.mxu0 0.0
        %1481 = vmatpush1.msra.mxu0 0.0
        %1482 = vmatprep.subr.mxu0 0.0
        %1483 = vmatpush1.msra.mxu0 0.0
        %1484 = vmatprep.subr.mxu0 0.0
        %1485 = vmatpush1.msra.mxu0 0.0
        %1486 = vmatprep.subr.mxu0 0.0
        %1487 = vmatpush1.msra.mxu0 0.0
        %1488 = vmatprep.subr.mxu0 0.0
        %1489 = vmatpush1.msra.mxu0 0.0
        %1490 = vmatprep.subr.mxu0 0.0
        %1491 = vmatpush1.msra.mxu0 0.0
        %1492 = vmatprep.subr.mxu0 0.0
        %1493 = vmatpush1.msra.mxu0 0.0
        %1494 = vmatprep.subr.mxu0 0.0
        %1495 = vmatpush1.msra.mxu0 0.0
        %1496 = vmatprep.subr.mxu0 0.0
        %1497 = vmatpush1.msra.mxu0 0.0
        %1498 = vmatprep.subr.mxu0 0.0
        %1499 = vmatpush1.msra.mxu0 0.0
        %1500 = vmatprep.subr.mxu0 0.0
        %1501 = vmatpush1.msra.mxu0 0.0
        %1502 = vmatprep.subr.mxu0 0.0
        %1503 = vmatpush1.msra.mxu0 0.0
        %1504 = vmatprep.subr.mxu0 0.0
        %1505 = vmatpush1.msra.mxu0 0.0
        %1506 = vmatprep.subr.mxu0 0.0
        %1507 = vmatpush1.msra.mxu0 0.0
        %1508 = vmatprep.subr.mxu0 0.0
        %1509 = vmatpush1.msra.mxu0 0.0
        %1510 = vmatprep.subr.mxu0 0.0
        %1511 = vmatpush1.msra.mxu0 0.0
        %1512 = vmatprep.subr.mxu0 0.0
        %1513 = vmatpush1.msra.mxu0 0.0
        %1514 = vmatprep.subr.mxu0 0.0
        %1515 = vmatpush1.msra.mxu0 0.0
        %1516 = vmatprep.subr.mxu0 0.0
        %1517 = vmatpush1.msra.mxu0 0.0
        %1518 = vmatprep.subr.mxu0 0.0
        %1519 = vmatpush1.msra.mxu0 0.0
        %1520 = vmatprep.subr.mxu0 0.0
        %1521 = vmatpush1.msra.mxu0 0.0
        %1522 = vmatprep.subr.mxu0 0.0
        %1523 = vmatpush1.msra.mxu0 0.0
        %1524 = vmatprep.subr.mxu0 0.0
        %1525 = vmatpush1.msra.mxu0 0.0
        %1526 = vmatprep.subr.mxu0 0.0
        %1527 = vmatpush1.msra.mxu0 0.0
        %1528 = vmatprep.subr.mxu0 0.0
        %1529 = vmatpush1.msra.mxu0 0.0
        %1530 = vmatprep.subr.mxu0 0.0
        %1531 = vmatpush1.msra.mxu0 0.0
        %1532 = vmatprep.mubr.f32.mxu0 0.0
        %1533 = vmatmul.mubr.f32.gmra.mrb[0].mxu0 %v1454
        %v1534 = vpop.f32.mrb[0].mxu0
        %v1535 = vadd.f32 %v1451, %v1534
        %v1536 = vpop.f32.mrb[0].mxu0
        %1537 = vmatprep.mubr.f32.mxu0 0.0
        %1538 = vmatmul.mubr.f32.gmra.mrb[0].mxu0 %v1457
        %v1539 = vpop.f32.mrb[0].mxu0
        %v1540 = vadd.f32 %v1451, %v1539
        %v1541 = vpop.f32.mrb[0].mxu0
        %1542 = vmatprep.mubr.f32.mxu0 0.0
        %1543 = vmatmul.mubr.f32.gmra.mrb[0].mxu0 %v1460
        %v1544 = vpop.f32.mrb[0].mxu0
        %v1545 = vadd.f32 %v1451, %v1544
        %v1546 = vpop.f32.mrb[0].mxu0
        %1547 = vmatprep.mubr.f32.mxu0 0.0
        %1548 = vmatmul.mubr.f32.gmra.mrb[0].mxu0 %v1463
        %v1549 = vpop.f32.mrb[0].mxu0
        %v1550 = vadd.f32 %v1451, %v1549
        %v1551 = vpop.f32.mrb[0].mxu0
        %1552 = vdwg.mxu0
        %vm1553 = vcmask 130048
        %1554 = vst.msk [vmem:[%s269] sm:$0xff] %vm1553, %v1535
        %1555 = vst.msk [vmem:[%s269 + $0x8] sm:$0xff] %vm1553, %v1540
        %1556 = vst.msk [vmem:[%s269 + $0x10] sm:$0xff] %vm1553, %v1545
        %1557 = vst.msk [vmem:[%s269 + $0x18] sm:$0xff] %vm1553, %v1550
        %s1558 = sand.u32 %s162, 1
        %s1559 = scalar_lea.sflag [#allocation4], %s1558
        %s1560 = sand.u32 %s162, 1
        %s1561 = smul.addr %s1560, 32
        %s1562 = scalar_lea.vmem [#allocation5], %s1561
        // Predicated region
        $region49: #{tpu_custom_call.1} parent=43 // pred_check
          %p1563 = pneg %p172
        $region50: #{tpu_custom_call.1} parent=43 // pred_check_branch
          %1565 = sbr.rel (%p1563) target = $region52
        $region51: #{tpu_custom_call.1} parent=43 // pred_region
          %s1566 = smul.u32 4, %s23
          %s1568 = ssub.s32 512, 512
          %1569 = vsyncadd %s1559, %s1568
          %s1570 = smul.addr %s1566, 128
          %s1571 = scalar_lea.hbm %s6, %s1570
          %s1572 = sshll.u32 %s1562, 4
          %s1573 = int_to_ptr.vmem [resolvable:$true] %s1572
          %1578 = dma.vmem_to_hbm [thread:$0]  %s1573, 512, %s1571, %s1559, 128, 128, 8
        $region52: #{tpu_custom_call.1} parent=43 // pred_fallthru
          _
      $region44: #{tpu_custom_call.1} parent=5 // pred_fallthru
        _
      %p1579 = scmp.le.s32.totalorder 2, %s18
      // Predicated region
      $region53: #{tpu_custom_call.1} parent=5 // pred_check
        %p1580 = pneg %p1579
      $region54: #{tpu_custom_call.1} parent=5 // pred_check_branch
        %1582 = sbr.rel (%p1580) target = $region56
      $region55: #{tpu_custom_call.1} parent=5 // pred_region
        %s1583 = ssub.s32 %s18, 2
        // Predicated region
        $region57: #{tpu_custom_call.1} parent=55 // pred_check
          %p1584 = pneg %p178
        $region58: #{tpu_custom_call.1} parent=55 // pred_check_branch
          %1586 = sbr.rel (%p1584) target = $region60
        $region59: #{tpu_custom_call.1} parent=55 // pred_region
          %s1587 = sand.u32 %s163, 1
          %s1588 = scalar_lea.sflag [#allocation4], %s1587
          %s1589 = sand.u32 %s163, 1
          %s1590 = smul.addr %s1589, 32
          %s1591 = scalar_lea.vmem [#allocation5], %s1590
          %1592 = dma.done %s1588, 512
        $region60: #{tpu_custom_call.1} parent=55 // pred_fallthru
          _
      $region56: #{tpu_custom_call.1} parent=5 // pred_fallthru
        _
    $region6: #{tpu_custom_call.1} parent=1 // loop_footer
      %s22 = sadd.s32 1, %s18
    $region7: #{tpu_custom_call.1} parent=1 // loop_footer_branch
      %17 = sbr.rel target = $region3
    $region8: #{tpu_custom_call.1} parent=1 // loop_exit
      _
    %1593 = vsyncpa [#allocation3], 1
    %s1594 = scalar_lea.sflag [#allocation3], 1
    %1595 = vsyncpa %s1594, 1
    %1596 = vsyncpa [#allocation4], 1
    %s1597 = scalar_lea.sflag [#allocation4], 1
    %1598 = vsyncpa %s1597, 1

</llo_original>
